<compile_context>
chip_gen: v6e
topology: v6e:2x2x1
jax: 0.10.0
libtpu: 0.0.40
codegen_flags: <defaults>
</compile_context>

<pallas_src>
import functools
import math

import jax
import jax.numpy as jnp
from jax import lax
from jax.experimental import pallas as pl
from jax.experimental.pallas import tpu as pltpu


# 48 MiB: raises the v5e/v6e scoped default, stays well under v7x's 64 MiB/TC physical
# VMEM; per-kernel double-buffered footprints below are <~4 MiB even at BERT-base sizes.
_VMEM_LIMIT = 48 * 1024 * 1024


def _compiler_params(dims):
    return pltpu.CompilerParams(dimension_semantics=dims,
                                vmem_limit_bytes=_VMEM_LIMIT)


def _pick_tile(dim, target, align):
    """Largest tile <= target that divides dim and is a multiple of `align`,
    else the full dim (full-extent blocks are always legal)."""
    if dim <= target:
        return dim
    t = (target // align) * align
    while t >= align:
        if dim % t == 0:
            return t
        t -= align
    return dim


# ----------------------------- Pallas kernels -------------------------------

def _linear_kernel(x_ref, w_ref, b_ref, o_ref, acc_ref, *, activation):
    k = pl.program_id(2)

    @pl.when(k == 0)
    def _():
        acc_ref[...] = jnp.zeros_like(acc_ref)

    acc_ref[...] += jnp.dot(x_ref[...], w_ref[...],
                            preferred_element_type=jnp.float32)

    @pl.when(k == pl.num_programs(2) - 1)
    def _():
        h = acc_ref[...] + b_ref[...]
        if activation == "gelu":
            # TODO(synk): tanh-approximate GELU; HF BERT default is exact erf GELU.
            c = jnp.float32(0.7978845608028654)  # sqrt(2/pi)
            h = 0.5 * h * (1.0 + jnp.tanh(c * (h + 0.044715 * h * h * h)))
        o_ref[...] = h.astype(o_ref.dtype)


def _matmul_res_ln_kernel(x_ref, w_ref, b_ref, res_ref, g_ref, beta_ref,
                          o_ref, acc_ref, *, eps):
    """Fused: (x @ w + b) + residual, then LayerNorm. N axis = full hidden."""
    k = pl.program_id(1)

    @pl.when(k == 0)
    def _():
        acc_ref[...] = jnp.zeros_like(acc_ref)

    acc_ref[...] += jnp.dot(x_ref[...], w_ref[...],
                            preferred_element_type=jnp.float32)

    @pl.when(k == pl.num_programs(1) - 1)
    def _():
        h = acc_ref[...] + b_ref[...] + res_ref[...].astype(jnp.float32)
        mu = jnp.mean(h, axis=-1, keepdims=True)
        var = jnp.mean(jnp.square(h - mu), axis=-1, keepdims=True)
        y = (h - mu) * lax.rsqrt(var + eps) * g_ref[...] + beta_ref[...]
        o_ref[...] = y.astype(o_ref.dtype)


def _layernorm_kernel(x_ref, g_ref, b_ref, o_ref, *, eps):
    h = x_ref[...].astype(jnp.float32)
    mu = jnp.mean(h, axis=-1, keepdims=True)
    var = jnp.mean(jnp.square(h - mu), axis=-1, keepdims=True)
    y = (h - mu) * lax.rsqrt(var + eps) * g_ref[...] + b_ref[...]
    o_ref[...] = y.astype(o_ref.dtype)


def _attention_kernel(q_ref, kt_ref, v_ref, m_ref, o_ref, *, scale):
    # Per grid step (one batch, one head, one q-row tile):
    #   q: (1,1,tq,dH)  kt: (1,1,dH,S)  v: (1,1,S,dH)  m: (1,1,S) additive f32 mask.
    q = q_ref[0, 0] * scale                             # scale folded into Q (tq,dH)
    s = jnp.dot(q, kt_ref[0, 0],                        # NN matmul, no XLU transpose
                preferred_element_type=jnp.float32)     # (tq, S) f32
    s = s + m_ref[0]                                    # (1, S) mask broadcast
    s = s - jnp.max(s, axis=-1, keepdims=True)
    p = jnp.exp(s)
    p = p / jnp.sum(p, axis=-1, keepdims=True)          # exact softmax (reference parity)
    ctx = jnp.dot(p.astype(v_ref.dtype), v_ref[0, 0],
                  preferred_element_type=jnp.float32)   # (tq, dH)
    o_ref[0, 0] = ctx.astype(o_ref.dtype)               # direct per-head store


# ----------------------------- wrappers --------------------------------------

def linear(x, w, b, activation=None, out_dtype=jnp.bfloat16,
           tm=256, tn=512, tk=1024):
    m, kdim = x.shape
    n = w.shape[1]
    tm = _pick_tile(m, tm, 16)     # 16-row align: bf16 packs two rows per sublane
    tn = _pick_tile(n, tn, 128)
    tk = _pick_tile(kdim, tk, 128)
    grid = (m // tm, n // tn, kdim // tk)
    # TODO(synk): on v5e add pipeline_mode=pl.Buffered(3) to the x/w K-stream specs.
    return pl.pallas_call(
        functools.partial(_linear_kernel, activation=activation),
        out_shape=jax.ShapeDtypeStruct((m, n), out_dtype),
        grid=grid,
        in_specs=[
            pl.BlockSpec((tm, tk), lambda i, j, k: (i, k)),
            pl.BlockSpec((tk, tn), lambda i, j, k: (k, j)),
            pl.BlockSpec((1, tn), lambda i, j, k: (0, j)),
        ],
        out_specs=pl.BlockSpec((tm, tn), lambda i, j, k: (i, j)),
        scratch_shapes=[pltpu.VMEM((tm, tn), jnp.float32)],
        compiler_params=_compiler_params(("parallel", "parallel", "arbitrary")),
    )(x, w, b)


def matmul_res_ln(x, w, b, res, g, beta, eps=1e-12, out_dtype=jnp.bfloat16,
                  tm=256, tk=1024):
    m, kdim = x.shape
    n = w.shape[1]
    tm = _pick_tile(m, tm, 16)
    tk = _pick_tile(kdim, tk, 128)
    grid = (m // tm, kdim // tk)
    return pl.pallas_call(
        functools.partial(_matmul_res_ln_kernel, eps=eps),
        out_shape=jax.ShapeDtypeStruct((m, n), out_dtype),
        grid=grid,
        in_specs=[
            pl.BlockSpec((tm, tk), lambda i, k: (i, k)),
            pl.BlockSpec((tk, n), lambda i, k: (k, 0)),
            pl.BlockSpec((1, n), lambda i, k: (0, 0)),
            pl.BlockSpec((tm, n), lambda i, k: (i, 0)),
            pl.BlockSpec((1, n), lambda i, k: (0, 0)),
            pl.BlockSpec((1, n), lambda i, k: (0, 0)),
        ],
        out_specs=pl.BlockSpec((tm, n), lambda i, k: (i, 0)),
        scratch_shapes=[pltpu.VMEM((tm, n), jnp.float32)],
        compiler_params=_compiler_params(("parallel", "arbitrary")),
    )(x, w, b, res, g, beta)


def layernorm(x, g, b, eps=1e-12, out_dtype=jnp.bfloat16, tm=512):
    m, n = x.shape
    tm = _pick_tile(m, tm, 16)
    grid = (m // tm,)
    return pl.pallas_call(
        functools.partial(_layernorm_kernel, eps=eps),
        out_shape=jax.ShapeDtypeStruct((m, n), out_dtype),
        grid=grid,
        in_specs=[
            pl.BlockSpec((tm, n), lambda i: (i, 0)),
            pl.BlockSpec((1, n), lambda i: (0, 0)),
            pl.BlockSpec((1, n), lambda i: (0, 0)),
        ],
        out_specs=pl.BlockSpec((tm, n), lambda i: (i, 0)),
        compiler_params=_compiler_params(("parallel",)),
    )(x, g, b)


def attention(q, kt, v, ext_mask, *, tq=256):
    """q,v: (B, nH, S, dH); kt: (B, nH, dH, S) pre-transposed; mask: (B, 1, S) f32."""
    B, nH, S, dH = q.shape
    tq = _pick_tile(S, tq, 8)
    scale = 1.0 / math.sqrt(dH)
    grid = (B, nH, S // tq)
    # TODO(synk): for very long sequences add a kv grid axis with an online-softmax
    # (flash-style) accumulator; full-S K/V per step is fine up to BERT-base sizes.
    return pl.pallas_call(
        functools.partial(_attention_kernel, scale=scale),
        out_shape=jax.ShapeDtypeStruct((B, nH, S, dH), q.dtype),
        grid=grid,
        in_specs=[
            pl.BlockSpec((1, 1, tq, dH), lambda b, h, i: (b, h, i, 0)),
            pl.BlockSpec((1, 1, dH, S), lambda b, h, i: (b, h, 0, 0)),
            pl.BlockSpec((1, 1, S, dH), lambda b, h, i: (b, h, 0, 0)),
            pl.BlockSpec((1, 1, S), lambda b, h, i: (b, 0, 0)),
        ],
        out_specs=pl.BlockSpec((1, 1, tq, dH), lambda b, h, i: (b, h, i, 0)),
        compiler_params=_compiler_params(("parallel", "parallel", "parallel")),
    )(q, kt, v, ext_mask)


# ----------------------------- parameters ------------------------------------

def init_params(
    key,
    *,
    vocab=128,
    hidden=32,
    heads=2,
    num_layers=2,
    intermediate=64,
    max_pos=16,
    type_vocab=2,
    num_labels=2,
):
    keys = iter(jax.random.split(key, 64))
    std = 0.02

    def w(shape, dtype=jnp.bfloat16):
        return (jax.random.normal(next(keys), shape, jnp.float32) * std).astype(dtype)

    def zeros(shape):
        return jnp.zeros(shape, jnp.float32)

    def ones(shape):
        return jnp.ones(shape, jnp.float32)

    params = {
        "embeddings": {
            "word": w((vocab, hidden), jnp.float32),
            "pos": w((max_pos, hidden), jnp.float32),
            "type": w((type_vocab, hidden), jnp.float32),
            "ln_g": ones((1, hidden)),
            "ln_b": zeros((1, hidden)),
        },
        "layers": [],
        "cls_w": w((hidden, num_labels)),
        "cls_b": zeros((1, num_labels)),
    }
    for _ in range(num_layers):
        params["layers"].append({
            # fused QKV projection: (H, 3H) weight, (1, 3H) bias, columns [Q | K | V]
            "qkv_w": w((hidden, 3 * hidden)),
            "qkv_b": zeros((1, 3 * hidden)),
            "ao_w": w((hidden, hidden)), "ao_b": zeros((1, hidden)),
            "ln1_g": ones((1, hidden)), "ln1_b": zeros((1, hidden)),
            "i_w": w((hidden, intermediate)), "i_b": zeros((1, intermediate)),
            "o_w": w((intermediate, hidden)), "o_b": zeros((1, hidden)),
            "ln2_g": ones((1, hidden)), "ln2_b": zeros((1, hidden)),
        })
    return params


# ----------------------------- forward ----------------------------------------

def classifier_forward(params, input_ids, attention_mask, *, hidden, heads):
    H, nH = hidden, heads
    dH = H // nH
    B, S = input_ids.shape
    emb = params["embeddings"]

    # Embeddings (gathers stay in XLA; LayerNorm runs in Pallas, output bf16).
    # TODO(synk): token_type_ids hard-coded to type 0 (the reference never passes them).
    x = jnp.take(emb["word"], input_ids, axis=0)                         # (B,S,H) f32
    x = x + emb["pos"][:S][None, :, :]
    x = x + emb["type"][0][None, None, :]
    h = layernorm(x.reshape(B * S, H), emb["ln_g"], emb["ln_b"])         # (B*S,H) bf16
    # embedding / attention / FFN dropout and self.input_dropout: identity (inference)

    # BERT extended attention mask: (1 - mask) * -10000, shape (B,1,S), f32.
    ext_mask = (1.0 - attention_mask.astype(jnp.float32))[:, None, :] * -10000.0

    for lp in params["layers"]:
        # Fused Q/K/V projection: one GEMM producing packed (B*S, 3H).
        qkv = linear(h, lp["qkv_w"], lp["qkv_b"])                        # bf16
        qkv = qkv.reshape(B, S, 3, nH, dH)
        q = qkv[:, :, 0].transpose(0, 2, 1, 3)                           # (B,nH,S,dH)
        kt = qkv[:, :, 1].transpose(0, 2, 3, 1)                          # (B,nH,dH,S)
        v = qkv[:, :, 2].transpose(0, 2, 1, 3)                           # (B,nH,S,dH)
        ctx = attention(q, kt, v, ext_mask)                              # (B,nH,S,dH)
        ctx = ctx.transpose(0, 2, 1, 3).reshape(B * S, H)                # (B*S,H) bf16
        # Fused: attn output projection + residual + LayerNorm.
        h = matmul_res_ln(ctx, lp["ao_w"], lp["ao_b"],
                          h, lp["ln1_g"], lp["ln1_b"])
        inter = linear(h, lp["i_w"], lp["i_b"], activation="gelu")       # (B*S,I) bf16
        # Fused: FFN down-projection + residual + LayerNorm.
        h = matmul_res_ln(inter, lp["o_w"], lp["o_b"],
                          h, lp["ln2_g"], lp["ln2_b"])

    last_hidden = h.reshape(B, S, H)
    encoded_cls = last_hidden[:, 0]                                      # (B, H) bf16

    # Classifier head: pad the label dim to 128 lanes so the Pallas store is
    # lane-dense (unmasked vst), then slice back to num_labels.
    cls_w, cls_b = params["cls_w"], params["cls_b"]
    num_labels = cls_w.shape[1]
    n_pad = ((num_labels + 127) // 128) * 128
    w_pad = jnp.zeros((H, n_pad), cls_w.dtype).at[:, :num_labels].set(cls_w)
    b_pad = jnp.zeros((1, n_pad), jnp.float32).at[:, :num_labels].set(cls_b)
    logits = linear(encoded_cls, w_pad, b_pad,
                    out_dtype=jnp.float32)[:, :num_labels]               # (B, num_labels)
    return logits, encoded_cls.astype(jnp.float32)


# ----------------------------- main --------------------------------------------

if __name__ == "__main__":
    key = jax.random.PRNGKey(0)
    pkey, ikey = jax.random.split(key)

    HIDDEN, HEADS, NUM_LABELS = 32, 2, 2
    params = init_params(pkey, hidden=HIDDEN, heads=HEADS, num_labels=NUM_LABELS)

    B, S, VOCAB = 2, 8, 128
    input_ids = jax.random.randint(ikey, (B, S), 0, VOCAB, dtype=jnp.int32)
    attention_mask = jnp.ones((B, S), dtype=jnp.int32)
    attention_mask = attention_mask.at[1, 6:].set(0)   # ragged second example

    fwd = jax.jit(functools.partial(classifier_forward, hidden=HIDDEN, heads=HEADS))
    logits, encoded_cls = fwd(params, input_ids, attention_mask)
    jax.block_until_ready((logits, encoded_cls))

    assert logits.shape == (B, NUM_LABELS)
    assert encoded_cls.shape == (B, HIDDEN)
    assert bool(jnp.all(jnp.isfinite(logits))) and bool(jnp.all(jnp.isfinite(encoded_cls)))
    print("KERNEL_OK")
</pallas_src>

<mosaic_0001>
module attributes {stable_mosaic.version = 11 : i64} {
  func.func @_layernorm_kernel(%arg0: i32, %arg1: memref<16x32xf32, #tpu.memory_space<vmem>>, %arg2: memref<1x32xf32, #tpu.memory_space<vmem>>, %arg3: memref<1x32xf32, #tpu.memory_space<vmem>>, %arg4: memref<16x32xbf16, #tpu.memory_space<vmem>>) attributes {dimension_semantics = [#tpu.dimension_semantics<parallel>], iteration_bounds = array<i64: 1>, scalar_prefetch = 0 : i64, scratch_operands = 0 : i64, tpu.core_type = #tpu.core_type<tc>, window_params = [{transform_indices = @transform_0, window_bounds = array<i64: 16, 32>}, {pipeline_mode = #tpu.pipeline_mode<synchronous>, transform_indices = @transform_1, window_bounds = array<i64: 1, 32>}, {pipeline_mode = #tpu.pipeline_mode<synchronous>, transform_indices = @transform_2, window_bounds = array<i64: 1, 32>}, {transform_indices = @transform_3, window_bounds = array<i64: 16, 32>}]} {
    %c0 = arith.constant 0 : index
    %c0_0 = arith.constant 0 : index
    %0 = vector.load %arg1[%c0, %c0_0] : memref<16x32xf32, #tpu.memory_space<vmem>>, vector<16x32xf32>
    %cst = arith.constant dense<0.000000e+00> : vector<16xf32>
    %1 = vector.multi_reduction <add>, %0, %cst [1] : vector<16x32xf32> to vector<16xf32>
    %2 = vector.shape_cast %1 : vector<16xf32> to vector<16x1xf32>
    %cst_1 = arith.constant 3.200000e+01 : f32
    %3 = vector.broadcast %cst_1 : f32 to vector<16x1xf32>
    %4 = arith.divf %2, %3 : vector<16x1xf32>
    %5 = vector.broadcast %4 : vector<16x1xf32> to vector<16x32xf32>
    %6 = arith.subf %0, %5 : vector<16x32xf32>
    %7 = arith.mulf %6, %6 : vector<16x32xf32>
    %cst_2 = arith.constant dense<0.000000e+00> : vector<16xf32>
    %8 = vector.multi_reduction <add>, %7, %cst_2 [1] : vector<16x32xf32> to vector<16xf32>
    %9 = vector.shape_cast %8 : vector<16xf32> to vector<16x1xf32>
    %cst_3 = arith.constant 3.200000e+01 : f32
    %10 = vector.broadcast %cst_3 : f32 to vector<16x1xf32>
    %11 = arith.divf %9, %10 : vector<16x1xf32>
    %12 = vector.broadcast %4 : vector<16x1xf32> to vector<16x32xf32>
    %13 = arith.subf %0, %12 : vector<16x32xf32>
    %cst_4 = arith.constant 9.99999996E-13 : f32
    %14 = vector.broadcast %cst_4 : f32 to vector<16x1xf32>
    %15 = arith.addf %11, %14 : vector<16x1xf32>
    %16 = math.rsqrt %15 : vector<16x1xf32>
    %17 = vector.broadcast %16 : vector<16x1xf32> to vector<16x32xf32>
    %18 = arith.mulf %13, %17 : vector<16x32xf32>
    %c0_5 = arith.constant 0 : index
    %c0_6 = arith.constant 0 : index
    %19 = vector.load %arg2[%c0_5, %c0_6] : memref<1x32xf32, #tpu.memory_space<vmem>>, vector<1x32xf32>
    %20 = vector.broadcast %19 : vector<1x32xf32> to vector<16x32xf32>
    %21 = arith.mulf %18, %20 : vector<16x32xf32>
    %c0_7 = arith.constant 0 : index
    %c0_8 = arith.constant 0 : index
    %22 = vector.load %arg3[%c0_7, %c0_8] : memref<1x32xf32, #tpu.memory_space<vmem>>, vector<1x32xf32>
    %23 = vector.broadcast %22 : vector<1x32xf32> to vector<16x32xf32>
    %24 = arith.addf %21, %23 : vector<16x32xf32>
    %25 = arith.truncf %24 : vector<16x32xf32> to vector<16x32xbf16>
    %c0_9 = arith.constant 0 : index
    %c0_10 = arith.constant 0 : index
    %26 = vector.load %arg4[%c0_9, %c0_10] : memref<16x32xbf16, #tpu.memory_space<vmem>>, vector<16x32xbf16>
    tpu.vector_store %arg4[%c0_9, %c0_10], %25 {strides = array<i32>} : memref<16x32xbf16, #tpu.memory_space<vmem>>, vector<16x32xbf16>,
    return
  }
  func.func @transform_0(%arg0: i32) -> (i32, i32) {
    %c0_i32 = arith.constant 0 : i32
    %c0_i32_0 = arith.constant 0 : i32
    return %arg0, %c0_i32 : i32, i32
  }
  func.func @transform_1(%arg0: i32) -> (i32, i32) {
    %c0_i32 = arith.constant 0 : i32
    %c0_i32_0 = arith.constant 0 : i32
    %c0_i32_1 = arith.constant 0 : i32
    return %c0_i32, %c0_i32_0 : i32, i32
  }
  func.func @transform_2(%arg0: i32) -> (i32, i32) {
    %c0_i32 = arith.constant 0 : i32
    %c0_i32_0 = arith.constant 0 : i32
    %c0_i32_1 = arith.constant 0 : i32
    return %c0_i32, %c0_i32_0 : i32, i32
  }
  func.func @transform_3(%arg0: i32) -> (i32, i32) {
    %c0_i32 = arith.constant 0 : i32
    %c0_i32_0 = arith.constant 0 : i32
    return %arg0, %c0_i32 : i32, i32
  }
}

module attributes {stable_mosaic.version = 11 : i64} {
  func.func @_linear_kernel(%arg0: i32, %arg1: i32, %arg2: i32, %arg3: memref<16x32xbf16, #tpu.memory_space<vmem>>, %arg4: memref<32x96xbf16, #tpu.memory_space<vmem>>, %arg5: memref<1x96xf32, #tpu.memory_space<vmem>>, %arg6: memref<16x96xbf16, #tpu.memory_space<vmem>>, %arg7: memref<16x96xf32, #tpu.memory_space<vmem>>) attributes {dimension_semantics = [#tpu.dimension_semantics<parallel>, #tpu.dimension_semantics<parallel>, #tpu.dimension_semantics<arbitrary>], iteration_bounds = array<i64: 1, 1, 1>, scalar_prefetch = 0 : i64, scratch_operands = 1 : i64, tpu.core_type = #tpu.core_type<tc>, window_params = [{transform_indices = @transform_0, window_bounds = array<i64: 16, 32>}, {transform_indices = @transform_1, window_bounds = array<i64: 32, 96>}, {transform_indices = @transform_2, window_bounds = array<i64: 1, 96>}, {transform_indices = @transform_3, window_bounds = array<i64: 16, 96>}]} {
    %c0_i32 = arith.constant 0 : i32
    %0 = arith.cmpi eq, %arg2, %c0_i32 : i32
    %1 = arith.extui %0 : i1 to i32
    %c0_i32_0 = arith.constant 0 : i32
    %2 = arith.cmpi ne, %1, %c0_i32_0 : i32
    scf.if %2 {
      %cst_10 = arith.constant 0.000000e+00 : f32
      %12 = vector.broadcast %cst_10 : f32 to vector<16x96xf32>
      %c0_11 = arith.constant 0 : index
      %c0_12 = arith.constant 0 : index
      %13 = vector.load %arg7[%c0_11, %c0_12] : memref<16x96xf32, #tpu.memory_space<vmem>>, vector<16x96xf32>
      tpu.vector_store %arg7[%c0_11, %c0_12], %12 {strides = array<i32>} : memref<16x96xf32, #tpu.memory_space<vmem>>, vector<16x96xf32>,
    } else {
    }
    %c0 = arith.constant 0 : index
    %c0_1 = arith.constant 0 : index
    %3 = vector.load %arg7[%c0, %c0_1] : memref<16x96xf32, #tpu.memory_space<vmem>>, vector<16x96xf32>
    %c0_2 = arith.constant 0 : index
    %c0_3 = arith.constant 0 : index
    %4 = vector.load %arg3[%c0_2, %c0_3] : memref<16x32xbf16, #tpu.memory_space<vmem>>, vector<16x32xbf16>
    %c0_4 = arith.constant 0 : index
    %c0_5 = arith.constant 0 : index
    %5 = vector.load %arg4[%c0_4, %c0_5] : memref<32x96xbf16, #tpu.memory_space<vmem>>, vector<32x96xbf16>
    %cst = arith.constant dense<0.000000e+00> : vector<16x96xf32>
    %6 = tpu.matmul %4, %5, %cst {dimension_numbers = #tpu.dot_dimension_numbers<[1], [0], [0], [1], [0, 0, 1, 1], [], []>} : vector<16x32xbf16>, vector<32x96xbf16>, vector<16x96xf32> -> vector<16x96xf32>
    %7 = arith.addf %3, %6 : vector<16x96xf32>
    %c0_6 = arith.constant 0 : index
    %c0_7 = arith.constant 0 : index
    %8 = vector.load %arg7[%c0_6, %c0_7] : memref<16x96xf32, #tpu.memory_space<vmem>>, vector<16x96xf32>
    tpu.vector_store %arg7[%c0_6, %c0_7], %7 {strides = array<i32>} : memref<16x96xf32, #tpu.memory_space<vmem>>, vector<16x96xf32>,
    %c0_i32_8 = arith.constant 0 : i32
    %9 = arith.cmpi eq, %arg2, %c0_i32_8 : i32
    %10 = arith.extui %9 : i1 to i32
    %c0_i32_9 = arith.constant 0 : i32
    %11 = arith.cmpi ne, %10, %c0_i32_9 : i32
    scf.if %11 {
      %c0_10 = arith.constant 0 : index
      %c0_11 = arith.constant 0 : index
      %12 = vector.load %arg7[%c0_10, %c0_11] : memref<16x96xf32, #tpu.memory_space<vmem>>, vector<16x96xf32>
      %c0_12 = arith.constant 0 : index
      %c0_13 = arith.constant 0 : index
      %13 = vector.load %arg5[%c0_12, %c0_13] : memref<1x96xf32, #tpu.memory_space<vmem>>, vector<1x96xf32>
      %14 = vector.broadcast %13 : vector<1x96xf32> to vector<16x96xf32>
      %15 = arith.addf %12, %14 : vector<16x96xf32>
      %16 = arith.truncf %15 : vector<16x96xf32> to vector<16x96xbf16>
      %c0_14 = arith.constant 0 : index
      %c0_15 = arith.constant 0 : index
      %17 = vector.load %arg6[%c0_14, %c0_15] : memref<16x96xbf16, #tpu.memory_space<vmem>>, vector<16x96xbf16>
      tpu.vector_store %arg6[%c0_14, %c0_15], %16 {strides = array<i32>} : memref<16x96xbf16, #tpu.memory_space<vmem>>, vector<16x96xbf16>,
    } else {
    }
    return
  }
  func.func @transform_0(%arg0: i32, %arg1: i32, %arg2: i32) -> (i32, i32) {
    %c0_i32 = arith.constant 0 : i32
    return %arg0, %arg2 : i32, i32
  }
  func.func @transform_1(%arg0: i32, %arg1: i32, %arg2: i32) -> (i32, i32) {
    %c0_i32 = arith.constant 0 : i32
    return %arg2, %arg1 : i32, i32
  }
  func.func @transform_2(%arg0: i32, %arg1: i32, %arg2: i32) -> (i32, i32) {
    %c0_i32 = arith.constant 0 : i32
    %c0_i32_0 = arith.constant 0 : i32
    return %c0_i32, %arg1 : i32, i32
  }
  func.func @transform_3(%arg0: i32, %arg1: i32, %arg2: i32) -> (i32, i32) {
    %c0_i32 = arith.constant 0 : i32
    return %arg0, %arg1 : i32, i32
  }
}

module attributes {stable_mosaic.version = 11 : i64} {
  func.func @_attention_kernel(%arg0: i32, %arg1: i32, %arg2: i32, %arg3: memref<1x1x8x16xbf16, #tpu.memory_space<vmem>>, %arg4: memref<1x1x16x8xbf16, #tpu.memory_space<vmem>>, %arg5: memref<1x1x8x16xbf16, #tpu.memory_space<vmem>>, %arg6: memref<1x1x8xf32, #tpu.memory_space<vmem>>, %arg7: memref<1x1x8x16xbf16, #tpu.memory_space<vmem>>) attributes {dimension_semantics = [#tpu.dimension_semantics<parallel>, #tpu.dimension_semantics<parallel>, #tpu.dimension_semantics<parallel>], iteration_bounds = array<i64: 2, 2, 1>, scalar_prefetch = 0 : i64, scratch_operands = 0 : i64, tpu.core_type = #tpu.core_type<tc>, window_params = [{transform_indices = @transform_0, window_bounds = array<i64: 1, 1, 8, 16>}, {transform_indices = @transform_1, window_bounds = array<i64: 1, 1, 16, 8>}, {transform_indices = @transform_2, window_bounds = array<i64: 1, 1, 8, 16>}, {transform_indices = @transform_3, window_bounds = array<i64: 1, 1, 8>}, {transform_indices = @transform_4, window_bounds = array<i64: 1, 1, 8, 16>}]} {
    %c0 = arith.constant 0 : index
    %c0_0 = arith.constant 0 : index
    %c0_1 = arith.constant 0 : index
    %c0_2 = arith.constant 0 : index
    %0 = vector.load %arg3[%c0, %c0_0, %c0_1, %c0_2] : memref<1x1x8x16xbf16, #tpu.memory_space<vmem>>, vector<1x1x8x16xbf16>
    %1 = vector.shape_cast %0 : vector<1x1x8x16xbf16> to vector<8x16xbf16>
    %cst = arith.constant 2.500000e-01 : bf16
    %2 = vector.broadcast %cst : bf16 to vector<8x16xbf16>
    %3 = arith.mulf %1, %2 : vector<8x16xbf16>
    %c0_3 = arith.constant 0 : index
    %c0_4 = arith.constant 0 : index
    %c0_5 = arith.constant 0 : index
    %c0_6 = arith.constant 0 : index
    %4 = vector.load %arg4[%c0_3, %c0_4, %c0_5, %c0_6] : memref<1x1x16x8xbf16, #tpu.memory_space<vmem>>, vector<1x1x16x8xbf16>
    %5 = vector.shape_cast %4 : vector<1x1x16x8xbf16> to vector<16x8xbf16>
    %cst_7 = arith.constant dense<0.000000e+00> : vector<8x8xf32>
    %6 = tpu.matmul %3, %5, %cst_7 {dimension_numbers = #tpu.dot_dimension_numbers<[1], [0], [0], [1], [0, 0, 1, 1], [], []>} : vector<8x16xbf16>, vector<16x8xbf16>, vector<8x8xf32> -> vector<8x8xf32>
    %c0_8 = arith.constant 0 : index
    %c0_9 = arith.constant 0 : index
    %c0_10 = arith.constant 0 : index
    %7 = vector.load %arg6[%c0_8, %c0_9, %c0_10] : memref<1x1x8xf32, #tpu.memory_space<vmem>>, vector<1x1x8xf32>
    %8 = vector.shape_cast %7 : vector<1x1x8xf32> to vector<1x8xf32>
    %9 = vector.broadcast %8 : vector<1x8xf32> to vector<8x8xf32>
    %10 = arith.addf %6, %9 : vector<8x8xf32>
    %cst_11 = arith.constant dense<0xFF800000> : vector<8xf32>
    %11 = vector.multi_reduction <maximumf>, %10, %cst_11 [1] : vector<8x8xf32> to vector<8xf32>
    %12 = vector.shape_cast %11 : vector<8xf32> to vector<8x1xf32>
    %13 = vector.broadcast %12 : vector<8x1xf32> to vector<8x8xf32>
    %14 = arith.subf %10, %13 : vector<8x8xf32>
    %15 = math.exp %14 : vector<8x8xf32>
    %cst_12 = arith.constant dense<0.000000e+00> : vector<8xf32>
    %16 = vector.multi_reduction <add>, %15, %cst_12 [1] : vector<8x8xf32> to vector<8xf32>
    %17 = vector.shape_cast %16 : vector<8xf32> to vector<8x1xf32>
    %18 = vector.broadcast %17 : vector<8x1xf32> to vector<8x8xf32>
    %19 = arith.divf %15, %18 : vector<8x8xf32>
    %20 = arith.truncf %19 : vector<8x8xf32> to vector<8x8xbf16>
    %c0_13 = arith.constant 0 : index
    %c0_14 = arith.constant 0 : index
    %c0_15 = arith.constant 0 : index
    %c0_16 = arith.constant 0 : index
    %21 = vector.load %arg5[%c0_13, %c0_14, %c0_15, %c0_16] : memref<1x1x8x16xbf16, #tpu.memory_space<vmem>>, vector<1x1x8x16xbf16>
    %22 = vector.shape_cast %21 : vector<1x1x8x16xbf16> to vector<8x16xbf16>
    %cst_17 = arith.constant dense<0.000000e+00> : vector<8x16xf32>
    %23 = tpu.matmul %20, %22, %cst_17 {dimension_numbers = #tpu.dot_dimension_numbers<[1], [0], [0], [1], [0, 0, 1, 1], [], []>} : vector<8x8xbf16>, vector<8x16xbf16>, vector<8x16xf32> -> vector<8x16xf32>
    %24 = arith.truncf %23 : vector<8x16xf32> to vector<8x16xbf16>
    %c0_18 = arith.constant 0 : index
    %c0_19 = arith.constant 0 : index
    %c0_20 = arith.constant 0 : index
    %c0_21 = arith.constant 0 : index
    %25 = vector.load %arg7[%c0_18, %c0_19, %c0_20, %c0_21] : memref<1x1x8x16xbf16, #tpu.memory_space<vmem>>, vector<1x1x8x16xbf16>
    %26 = vector.shape_cast %25 : vector<1x1x8x16xbf16> to vector<8x16xbf16>
    %27 = vector.shape_cast %24 : vector<8x16xbf16> to vector<1x1x8x16xbf16>
    tpu.vector_store %arg7[%c0_18, %c0_19, %c0_20, %c0_21], %27 {strides = array<i32>} : memref<1x1x8x16xbf16, #tpu.memory_space<vmem>>, vector<1x1x8x16xbf16>,
    return
  }
  func.func @transform_0(%arg0: i32, %arg1: i32, %arg2: i32) -> (i32, i32, i32, i32) {
    %c0_i32 = arith.constant 0 : i32
    %c0_i32_0 = arith.constant 0 : i32
    return %arg0, %arg1, %arg2, %c0_i32 : i32, i32, i32, i32
  }
  func.func @transform_1(%arg0: i32, %arg1: i32, %arg2: i32) -> (i32, i32, i32, i32) {
    %c0_i32 = arith.constant 0 : i32
    %c0_i32_0 = arith.constant 0 : i32
    %c0_i32_1 = arith.constant 0 : i32
    return %arg0, %arg1, %c0_i32, %c0_i32_0 : i32, i32, i32, i32
  }
  func.func @transform_2(%arg0: i32, %arg1: i32, %arg2: i32) -> (i32, i32, i32, i32) {
    %c0_i32 = arith.constant 0 : i32
    %c0_i32_0 = arith.constant 0 : i32
    %c0_i32_1 = arith.constant 0 : i32
    return %arg0, %arg1, %c0_i32, %c0_i32_0 : i32, i32, i32, i32
  }
  func.func @transform_3(%arg0: i32, %arg1: i32, %arg2: i32) -> (i32, i32, i32) {
    %c0_i32 = arith.constant 0 : i32
    %c0_i32_0 = arith.constant 0 : i32
    %c0_i32_1 = arith.constant 0 : i32
    return %arg0, %c0_i32, %c0_i32_0 : i32, i32, i32
  }
  func.func @transform_4(%arg0: i32, %arg1: i32, %arg2: i32) -> (i32, i32, i32, i32) {
    %c0_i32 = arith.constant 0 : i32
    %c0_i32_0 = arith.constant 0 : i32
    return %arg0, %arg1, %arg2, %c0_i32 : i32, i32, i32, i32
  }
}

module attributes {stable_mosaic.version = 11 : i64} {
  func.func @_matmul_res_ln_kernel(%arg0: i32, %arg1: i32, %arg2: memref<16x32xbf16, #tpu.memory_space<vmem>>, %arg3: memref<32x32xbf16, #tpu.memory_space<vmem>>, %arg4: memref<1x32xf32, #tpu.memory_space<vmem>>, %arg5: memref<16x32xbf16, #tpu.memory_space<vmem>>, %arg6: memref<1x32xf32, #tpu.memory_space<vmem>>, %arg7: memref<1x32xf32, #tpu.memory_space<vmem>>, %arg8: memref<16x32xbf16, #tpu.memory_space<vmem>>, %arg9: memref<16x32xf32, #tpu.memory_space<vmem>>) attributes {dimension_semantics = [#tpu.dimension_semantics<parallel>, #tpu.dimension_semantics<arbitrary>], iteration_bounds = array<i64: 1, 1>, scalar_prefetch = 0 : i64, scratch_operands = 1 : i64, tpu.core_type = #tpu.core_type<tc>, window_params = [{transform_indices = @transform_0, window_bounds = array<i64: 16, 32>}, {transform_indices = @transform_1, window_bounds = array<i64: 32, 32>}, {pipeline_mode = #tpu.pipeline_mode<synchronous>, transform_indices = @transform_2, window_bounds = array<i64: 1, 32>}, {transform_indices = @transform_3, window_bounds = array<i64: 16, 32>}, {pipeline_mode = #tpu.pipeline_mode<synchronous>, transform_indices = @transform_4, window_bounds = array<i64: 1, 32>}, {pipeline_mode = #tpu.pipeline_mode<synchronous>, transform_indices = @transform_5, window_bounds = array<i64: 1, 32>}, {transform_indices = @transform_6, window_bounds = array<i64: 16, 32>}]} {
    %c0_i32 = arith.constant 0 : i32
    %0 = arith.cmpi eq, %arg1, %c0_i32 : i32
    %1 = arith.extui %0 : i1 to i32
    %c0_i32_0 = arith.constant 0 : i32
    %2 = arith.cmpi ne, %1, %c0_i32_0 : i32
    scf.if %2 {
      %cst_10 = arith.constant 0.000000e+00 : f32
      %12 = vector.broadcast %cst_10 : f32 to vector<16x32xf32>
      %c0_11 = arith.constant 0 : index
      %c0_12 = arith.constant 0 : index
      %13 = vector.load %arg9[%c0_11, %c0_12] : memref<16x32xf32, #tpu.memory_space<vmem>>, vector<16x32xf32>
      tpu.vector_store %arg9[%c0_11, %c0_12], %12 {strides = array<i32>} : memref<16x32xf32, #tpu.memory_space<vmem>>, vector<16x32xf32>,
    } else {
    }
    %c0 = arith.constant 0 : index
    %c0_1 = arith.constant 0 : index
    %3 = vector.load %arg9[%c0, %c0_1] : memref<16x32xf32, #tpu.memory_space<vmem>>, vector<16x32xf32>
    %c0_2 = arith.constant 0 : index
    %c0_3 = arith.constant 0 : index
    %4 = vector.load %arg2[%c0_2, %c0_3] : memref<16x32xbf16, #tpu.memory_space<vmem>>, vector<16x32xbf16>
    %c0_4 = arith.constant 0 : index
    %c0_5 = arith.constant 0 : index
    %5 = vector.load %arg3[%c0_4, %c0_5] : memref<32x32xbf16, #tpu.memory_space<vmem>>, vector<32x32xbf16>
    %cst = arith.constant dense<0.000000e+00> : vector<16x32xf32>
    %6 = tpu.matmul %4, %5, %cst {dimension_numbers = #tpu.dot_dimension_numbers<[1], [0], [0], [1], [0, 0, 1, 1], [], []>} : vector<16x32xbf16>, vector<32x32xbf16>, vector<16x32xf32> -> vector<16x32xf32>
    %7 = arith.addf %3, %6 : vector<16x32xf32>
    %c0_6 = arith.constant 0 : index
    %c0_7 = arith.constant 0 : index
    %8 = vector.load %arg9[%c0_6, %c0_7] : memref<16x32xf32, #tpu.memory_space<vmem>>, vector<16x32xf32>
    tpu.vector_store %arg9[%c0_6, %c0_7], %7 {strides = array<i32>} : memref<16x32xf32, #tpu.memory_space<vmem>>, vector<16x32xf32>,
    %c0_i32_8 = arith.constant 0 : i32
    %9 = arith.cmpi eq, %arg1, %c0_i32_8 : i32
    %10 = arith.extui %9 : i1 to i32
    %c0_i32_9 = arith.constant 0 : i32
    %11 = arith.cmpi ne, %10, %c0_i32_9 : i32
    scf.if %11 {
      %c0_10 = arith.constant 0 : index
      %c0_11 = arith.constant 0 : index
      %12 = vector.load %arg9[%c0_10, %c0_11] : memref<16x32xf32, #tpu.memory_space<vmem>>, vector<16x32xf32>
      %c0_12 = arith.constant 0 : index
      %c0_13 = arith.constant 0 : index
      %13 = vector.load %arg4[%c0_12, %c0_13] : memref<1x32xf32, #tpu.memory_space<vmem>>, vector<1x32xf32>
      %14 = vector.broadcast %13 : vector<1x32xf32> to vector<16x32xf32>
      %15 = arith.addf %12, %14 : vector<16x32xf32>
      %c0_14 = arith.constant 0 : index
      %c0_15 = arith.constant 0 : index
      %16 = vector.load %arg5[%c0_14, %c0_15] : memref<16x32xbf16, #tpu.memory_space<vmem>>, vector<16x32xbf16>
      %17 = arith.extf %16 : vector<16x32xbf16> to vector<16x32xf32>
      %18 = arith.addf %15, %17 : vector<16x32xf32>
      %cst_16 = arith.constant dense<0.000000e+00> : vector<16xf32>
      %19 = vector.multi_reduction <add>, %18, %cst_16 [1] : vector<16x32xf32> to vector<16xf32>
      %20 = vector.shape_cast %19 : vector<16xf32> to vector<16x1xf32>
      %cst_17 = arith.constant 3.200000e+01 : f32
      %21 = vector.broadcast %cst_17 : f32 to vector<16x1xf32>
      %22 = arith.divf %20, %21 : vector<16x1xf32>
      %23 = vector.broadcast %22 : vector<16x1xf32> to vector<16x32xf32>
      %24 = arith.subf %18, %23 : vector<16x32xf32>
      %25 = arith.mulf %24, %24 : vector<16x32xf32>
      %cst_18 = arith.constant dense<0.000000e+00> : vector<16xf32>
      %26 = vector.multi_reduction <add>, %25, %cst_18 [1] : vector<16x32xf32> to vector<16xf32>
      %27 = vector.shape_cast %26 : vector<16xf32> to vector<16x1xf32>
      %cst_19 = arith.constant 3.200000e+01 : f32
      %28 = vector.broadcast %cst_19 : f32 to vector<16x1xf32>
      %29 = arith.divf %27, %28 : vector<16x1xf32>
      %30 = vector.broadcast %22 : vector<16x1xf32> to vector<16x32xf32>
      %31 = arith.subf %18, %30 : vector<16x32xf32>
      %cst_20 = arith.constant 9.99999996E-13 : f32
      %32 = vector.broadcast %cst_20 : f32 to vector<16x1xf32>
      %33 = arith.addf %29, %32 : vector<16x1xf32>
      %34 = math.rsqrt %33 : vector<16x1xf32>
      %35 = vector.broadcast %34 : vector<16x1xf32> to vector<16x32xf32>
      %36 = arith.mulf %31, %35 : vector<16x32xf32>
      %c0_21 = arith.constant 0 : index
      %c0_22 = arith.constant 0 : index
      %37 = vector.load %arg6[%c0_21, %c0_22] : memref<1x32xf32, #tpu.memory_space<vmem>>, vector<1x32xf32>
      %38 = vector.broadcast %37 : vector<1x32xf32> to vector<16x32xf32>
      %39 = arith.mulf %36, %38 : vector<16x32xf32>
      %c0_23 = arith.constant 0 : index
      %c0_24 = arith.constant 0 : index
      %40 = vector.load %arg7[%c0_23, %c0_24] : memref<1x32xf32, #tpu.memory_space<vmem>>, vector<1x32xf32>
      %41 = vector.broadcast %40 : vector<1x32xf32> to vector<16x32xf32>
      %42 = arith.addf %39, %41 : vector<16x32xf32>
      %43 = arith.truncf %42 : vector<16x32xf32> to vector<16x32xbf16>
      %c0_25 = arith.constant 0 : index
      %c0_26 = arith.constant 0 : index
      %44 = vector.load %arg8[%c0_25, %c0_26] : memref<16x32xbf16, #tpu.memory_space<vmem>>, vector<16x32xbf16>
      tpu.vector_store %arg8[%c0_25, %c0_26], %43 {strides = array<i32>} : memref<16x32xbf16, #tpu.memory_space<vmem>>, vector<16x32xbf16>,
    } else {
    }
    return
  }
  func.func @transform_0(%arg0: i32, %arg1: i32) -> (i32, i32) {
    %c0_i32 = arith.constant 0 : i32
    return %arg0, %arg1 : i32, i32
  }
  func.func @transform_1(%arg0: i32, %arg1: i32) -> (i32, i32) {
    %c0_i32 = arith.constant 0 : i32
    %c0_i32_0 = arith.constant 0 : i32
    return %arg1, %c0_i32 : i32, i32
  }
  func.func @transform_2(%arg0: i32, %arg1: i32) -> (i32, i32) {
    %c0_i32 = arith.constant 0 : i32
    %c0_i32_0 = arith.constant 0 : i32
    %c0_i32_1 = arith.constant 0 : i32
    return %c0_i32, %c0_i32_0 : i32, i32
  }
  func.func @transform_3(%arg0: i32, %arg1: i32) -> (i32, i32) {
    %c0_i32 = arith.constant 0 : i32
    %c0_i32_0 = arith.constant 0 : i32
    return %arg0, %c0_i32 : i32, i32
  }
  func.func @transform_4(%arg0: i32, %arg1: i32) -> (i32, i32) {
    %c0_i32 = arith.constant 0 : i32
    %c0_i32_0 = arith.constant 0 : i32
    %c0_i32_1 = arith.constant 0 : i32
    return %c0_i32, %c0_i32_0 : i32, i32
  }
  func.func @transform_5(%arg0: i32, %arg1: i32) -> (i32, i32) {
    %c0_i32 = arith.constant 0 : i32
    %c0_i32_0 = arith.constant 0 : i32
    %c0_i32_1 = arith.constant 0 : i32
    return %c0_i32, %c0_i32_0 : i32, i32
  }
  func.func @transform_6(%arg0: i32, %arg1: i32) -> (i32, i32) {
    %c0_i32 = arith.constant 0 : i32
    %c0_i32_0 = arith.constant 0 : i32
    return %arg0, %c0_i32 : i32, i32
  }
}

module attributes {stable_mosaic.version = 11 : i64} {
  func.func @_linear_kernel(%arg0: i32, %arg1: i32, %arg2: i32, %arg3: memref<16x32xbf16, #tpu.memory_space<vmem>>, %arg4: memref<32x64xbf16, #tpu.memory_space<vmem>>, %arg5: memref<1x64xf32, #tpu.memory_space<vmem>>, %arg6: memref<16x64xbf16, #tpu.memory_space<vmem>>, %arg7: memref<16x64xf32, #tpu.memory_space<vmem>>) attributes {dimension_semantics = [#tpu.dimension_semantics<parallel>, #tpu.dimension_semantics<parallel>, #tpu.dimension_semantics<arbitrary>], iteration_bounds = array<i64: 1, 1, 1>, scalar_prefetch = 0 : i64, scratch_operands = 1 : i64, tpu.core_type = #tpu.core_type<tc>, window_params = [{transform_indices = @transform_0, window_bounds = array<i64: 16, 32>}, {transform_indices = @transform_1, window_bounds = array<i64: 32, 64>}, {transform_indices = @transform_2, window_bounds = array<i64: 1, 64>}, {transform_indices = @transform_3, window_bounds = array<i64: 16, 64>}]} {
    %c0_i32 = arith.constant 0 : i32
    %0 = arith.cmpi eq, %arg2, %c0_i32 : i32
    %1 = arith.extui %0 : i1 to i32
    %c0_i32_0 = arith.constant 0 : i32
    %2 = arith.cmpi ne, %1, %c0_i32_0 : i32
    scf.if %2 {
      %cst_10 = arith.constant 0.000000e+00 : f32
      %12 = vector.broadcast %cst_10 : f32 to vector<16x64xf32>
      %c0_11 = arith.constant 0 : index
      %c0_12 = arith.constant 0 : index
      %13 = vector.load %arg7[%c0_11, %c0_12] : memref<16x64xf32, #tpu.memory_space<vmem>>, vector<16x64xf32>
      tpu.vector_store %arg7[%c0_11, %c0_12], %12 {strides = array<i32>} : memref<16x64xf32, #tpu.memory_space<vmem>>, vector<16x64xf32>,
    } else {
    }
    %c0 = arith.constant 0 : index
    %c0_1 = arith.constant 0 : index
    %3 = vector.load %arg7[%c0, %c0_1] : memref<16x64xf32, #tpu.memory_space<vmem>>, vector<16x64xf32>
    %c0_2 = arith.constant 0 : index
    %c0_3 = arith.constant 0 : index
    %4 = vector.load %arg3[%c0_2, %c0_3] : memref<16x32xbf16, #tpu.memory_space<vmem>>, vector<16x32xbf16>
    %c0_4 = arith.constant 0 : index
    %c0_5 = arith.constant 0 : index
    %5 = vector.load %arg4[%c0_4, %c0_5] : memref<32x64xbf16, #tpu.memory_space<vmem>>, vector<32x64xbf16>
    %cst = arith.constant dense<0.000000e+00> : vector<16x64xf32>
    %6 = tpu.matmul %4, %5, %cst {dimension_numbers = #tpu.dot_dimension_numbers<[1], [0], [0], [1], [0, 0, 1, 1], [], []>} : vector<16x32xbf16>, vector<32x64xbf16>, vector<16x64xf32> -> vector<16x64xf32>
    %7 = arith.addf %3, %6 : vector<16x64xf32>
    %c0_6 = arith.constant 0 : index
    %c0_7 = arith.constant 0 : index
    %8 = vector.load %arg7[%c0_6, %c0_7] : memref<16x64xf32, #tpu.memory_space<vmem>>, vector<16x64xf32>
    tpu.vector_store %arg7[%c0_6, %c0_7], %7 {strides = array<i32>} : memref<16x64xf32, #tpu.memory_space<vmem>>, vector<16x64xf32>,
    %c0_i32_8 = arith.constant 0 : i32
    %9 = arith.cmpi eq, %arg2, %c0_i32_8 : i32
    %10 = arith.extui %9 : i1 to i32
    %c0_i32_9 = arith.constant 0 : i32
    %11 = arith.cmpi ne, %10, %c0_i32_9 : i32
    scf.if %11 {
      %c0_10 = arith.constant 0 : index
      %c0_11 = arith.constant 0 : index
      %12 = vector.load %arg7[%c0_10, %c0_11] : memref<16x64xf32, #tpu.memory_space<vmem>>, vector<16x64xf32>
      %c0_12 = arith.constant 0 : index
      %c0_13 = arith.constant 0 : index
      %13 = vector.load %arg5[%c0_12, %c0_13] : memref<1x64xf32, #tpu.memory_space<vmem>>, vector<1x64xf32>
      %14 = vector.broadcast %13 : vector<1x64xf32> to vector<16x64xf32>
      %15 = arith.addf %12, %14 : vector<16x64xf32>
      %cst_14 = arith.constant 5.000000e-01 : f32
      %16 = vector.broadcast %cst_14 : f32 to vector<16x64xf32>
      %17 = arith.mulf %16, %15 : vector<16x64xf32>
      %cst_15 = arith.constant 4.471500e-02 : f32
      %18 = vector.broadcast %cst_15 : f32 to vector<16x64xf32>
      %19 = arith.mulf %18, %15 : vector<16x64xf32>
      %20 = arith.mulf %19, %15 : vector<16x64xf32>
      %21 = arith.mulf %20, %15 : vector<16x64xf32>
      %22 = arith.addf %15, %21 : vector<16x64xf32>
      %cst_16 = arith.constant 0.797884583 : f32
      %23 = vector.broadcast %cst_16 : f32 to vector<16x64xf32>
      %24 = arith.mulf %23, %22 : vector<16x64xf32>
      %25 = math.tanh %24 : vector<16x64xf32>
      %cst_17 = arith.constant 1.000000e+00 : f32
      %26 = vector.broadcast %cst_17 : f32 to vector<16x64xf32>
      %27 = arith.addf %26, %25 : vector<16x64xf32>
      %28 = arith.mulf %17, %27 : vector<16x64xf32>
      %29 = arith.truncf %28 : vector<16x64xf32> to vector<16x64xbf16>
      %c0_18 = arith.constant 0 : index
      %c0_19 = arith.constant 0 : index
      %30 = vector.load %arg6[%c0_18, %c0_19] : memref<16x64xbf16, #tpu.memory_space<vmem>>, vector<16x64xbf16>
      tpu.vector_store %arg6[%c0_18, %c0_19], %29 {strides = array<i32>} : memref<16x64xbf16, #tpu.memory_space<vmem>>, vector<16x64xbf16>,
    } else {
    }
    return
  }
  func.func @transform_0(%arg0: i32, %arg1: i32, %arg2: i32) -> (i32, i32) {
    %c0_i32 = arith.constant 0 : i32
    return %arg0, %arg2 : i32, i32
  }
  func.func @transform_1(%arg0: i32, %arg1: i32, %arg2: i32) -> (i32, i32) {
    %c0_i32 = arith.constant 0 : i32
    return %arg2, %arg1 : i32, i32
  }
  func.func @transform_2(%arg0: i32, %arg1: i32, %arg2: i32) -> (i32, i32) {
    %c0_i32 = arith.constant 0 : i32
    %c0_i32_0 = arith.constant 0 : i32
    return %c0_i32, %arg1 : i32, i32
  }
  func.func @transform_3(%arg0: i32, %arg1: i32, %arg2: i32) -> (i32, i32) {
    %c0_i32 = arith.constant 0 : i32
    return %arg0, %arg1 : i32, i32
  }
}

module attributes {stable_mosaic.version = 11 : i64} {
  func.func @_matmul_res_ln_kernel(%arg0: i32, %arg1: i32, %arg2: memref<16x64xbf16, #tpu.memory_space<vmem>>, %arg3: memref<64x32xbf16, #tpu.memory_space<vmem>>, %arg4: memref<1x32xf32, #tpu.memory_space<vmem>>, %arg5: memref<16x32xbf16, #tpu.memory_space<vmem>>, %arg6: memref<1x32xf32, #tpu.memory_space<vmem>>, %arg7: memref<1x32xf32, #tpu.memory_space<vmem>>, %arg8: memref<16x32xbf16, #tpu.memory_space<vmem>>, %arg9: memref<16x32xf32, #tpu.memory_space<vmem>>) attributes {dimension_semantics = [#tpu.dimension_semantics<parallel>, #tpu.dimension_semantics<arbitrary>], iteration_bounds = array<i64: 1, 1>, scalar_prefetch = 0 : i64, scratch_operands = 1 : i64, tpu.core_type = #tpu.core_type<tc>, window_params = [{transform_indices = @transform_0, window_bounds = array<i64: 16, 64>}, {transform_indices = @transform_1, window_bounds = array<i64: 64, 32>}, {pipeline_mode = #tpu.pipeline_mode<synchronous>, transform_indices = @transform_2, window_bounds = array<i64: 1, 32>}, {transform_indices = @transform_3, window_bounds = array<i64: 16, 32>}, {pipeline_mode = #tpu.pipeline_mode<synchronous>, transform_indices = @transform_4, window_bounds = array<i64: 1, 32>}, {pipeline_mode = #tpu.pipeline_mode<synchronous>, transform_indices = @transform_5, window_bounds = array<i64: 1, 32>}, {transform_indices = @transform_6, window_bounds = array<i64: 16, 32>}]} {
    %c0_i32 = arith.constant 0 : i32
    %0 = arith.cmpi eq, %arg1, %c0_i32 : i32
    %1 = arith.extui %0 : i1 to i32
    %c0_i32_0 = arith.constant 0 : i32
    %2 = arith.cmpi ne, %1, %c0_i32_0 : i32
    scf.if %2 {
      %cst_10 = arith.constant 0.000000e+00 : f32
      %12 = vector.broadcast %cst_10 : f32 to vector<16x32xf32>
      %c0_11 = arith.constant 0 : index
      %c0_12 = arith.constant 0 : index
      %13 = vector.load %arg9[%c0_11, %c0_12] : memref<16x32xf32, #tpu.memory_space<vmem>>, vector<16x32xf32>
      tpu.vector_store %arg9[%c0_11, %c0_12], %12 {strides = array<i32>} : memref<16x32xf32, #tpu.memory_space<vmem>>, vector<16x32xf32>,
    } else {
    }
    %c0 = arith.constant 0 : index
    %c0_1 = arith.constant 0 : index
    %3 = vector.load %arg9[%c0, %c0_1] : memref<16x32xf32, #tpu.memory_space<vmem>>, vector<16x32xf32>
    %c0_2 = arith.constant 0 : index
    %c0_3 = arith.constant 0 : index
    %4 = vector.load %arg2[%c0_2, %c0_3] : memref<16x64xbf16, #tpu.memory_space<vmem>>, vector<16x64xbf16>
    %c0_4 = arith.constant 0 : index
    %c0_5 = arith.constant 0 : index
    %5 = vector.load %arg3[%c0_4, %c0_5] : memref<64x32xbf16, #tpu.memory_space<vmem>>, vector<64x32xbf16>
    %cst = arith.constant dense<0.000000e+00> : vector<16x32xf32>
    %6 = tpu.matmul %4, %5, %cst {dimension_numbers = #tpu.dot_dimension_numbers<[1], [0], [0], [1], [0, 0, 1, 1], [], []>} : vector<16x64xbf16>, vector<64x32xbf16>, vector<16x32xf32> -> vector<16x32xf32>
    %7 = arith.addf %3, %6 : vector<16x32xf32>
    %c0_6 = arith.constant 0 : index
    %c0_7 = arith.constant 0 : index
    %8 = vector.load %arg9[%c0_6, %c0_7] : memref<16x32xf32, #tpu.memory_space<vmem>>, vector<16x32xf32>
    tpu.vector_store %arg9[%c0_6, %c0_7], %7 {strides = array<i32>} : memref<16x32xf32, #tpu.memory_space<vmem>>, vector<16x32xf32>,
    %c0_i32_8 = arith.constant 0 : i32
    %9 = arith.cmpi eq, %arg1, %c0_i32_8 : i32
    %10 = arith.extui %9 : i1 to i32
    %c0_i32_9 = arith.constant 0 : i32
    %11 = arith.cmpi ne, %10, %c0_i32_9 : i32
    scf.if %11 {
      %c0_10 = arith.constant 0 : index
      %c0_11 = arith.constant 0 : index
      %12 = vector.load %arg9[%c0_10, %c0_11] : memref<16x32xf32, #tpu.memory_space<vmem>>, vector<16x32xf32>
      %c0_12 = arith.constant 0 : index
      %c0_13 = arith.constant 0 : index
      %13 = vector.load %arg4[%c0_12, %c0_13] : memref<1x32xf32, #tpu.memory_space<vmem>>, vector<1x32xf32>
      %14 = vector.broadcast %13 : vector<1x32xf32> to vector<16x32xf32>
      %15 = arith.addf %12, %14 : vector<16x32xf32>
      %c0_14 = arith.constant 0 : index
      %c0_15 = arith.constant 0 : index
      %16 = vector.load %arg5[%c0_14, %c0_15] : memref<16x32xbf16, #tpu.memory_space<vmem>>, vector<16x32xbf16>
      %17 = arith.extf %16 : vector<16x32xbf16> to vector<16x32xf32>
      %18 = arith.addf %15, %17 : vector<16x32xf32>
      %cst_16 = arith.constant dense<0.000000e+00> : vector<16xf32>
      %19 = vector.multi_reduction <add>, %18, %cst_16 [1] : vector<16x32xf32> to vector<16xf32>
      %20 = vector.shape_cast %19 : vector<16xf32> to vector<16x1xf32>
      %cst_17 = arith.constant 3.200000e+01 : f32
      %21 = vector.broadcast %cst_17 : f32 to vector<16x1xf32>
      %22 = arith.divf %20, %21 : vector<16x1xf32>
      %23 = vector.broadcast %22 : vector<16x1xf32> to vector<16x32xf32>
      %24 = arith.subf %18, %23 : vector<16x32xf32>
      %25 = arith.mulf %24, %24 : vector<16x32xf32>
      %cst_18 = arith.constant dense<0.000000e+00> : vector<16xf32>
      %26 = vector.multi_reduction <add>, %25, %cst_18 [1] : vector<16x32xf32> to vector<16xf32>
      %27 = vector.shape_cast %26 : vector<16xf32> to vector<16x1xf32>
      %cst_19 = arith.constant 3.200000e+01 : f32
      %28 = vector.broadcast %cst_19 : f32 to vector<16x1xf32>
      %29 = arith.divf %27, %28 : vector<16x1xf32>
      %30 = vector.broadcast %22 : vector<16x1xf32> to vector<16x32xf32>
      %31 = arith.subf %18, %30 : vector<16x32xf32>
      %cst_20 = arith.constant 9.99999996E-13 : f32
      %32 = vector.broadcast %cst_20 : f32 to vector<16x1xf32>
      %33 = arith.addf %29, %32 : vector<16x1xf32>
      %34 = math.rsqrt %33 : vector<16x1xf32>
      %35 = vector.broadcast %34 : vector<16x1xf32> to vector<16x32xf32>
      %36 = arith.mulf %31, %35 : vector<16x32xf32>
      %c0_21 = arith.constant 0 : index
      %c0_22 = arith.constant 0 : index
      %37 = vector.load %arg6[%c0_21, %c0_22] : memref<1x32xf32, #tpu.memory_space<vmem>>, vector<1x32xf32>
      %38 = vector.broadcast %37 : vector<1x32xf32> to vector<16x32xf32>
      %39 = arith.mulf %36, %38 : vector<16x32xf32>
      %c0_23 = arith.constant 0 : index
      %c0_24 = arith.constant 0 : index
      %40 = vector.load %arg7[%c0_23, %c0_24] : memref<1x32xf32, #tpu.memory_space<vmem>>, vector<1x32xf32>
      %41 = vector.broadcast %40 : vector<1x32xf32> to vector<16x32xf32>
      %42 = arith.addf %39, %41 : vector<16x32xf32>
      %43 = arith.truncf %42 : vector<16x32xf32> to vector<16x32xbf16>
      %c0_25 = arith.constant 0 : index
      %c0_26 = arith.constant 0 : index
      %44 = vector.load %arg8[%c0_25, %c0_26] : memref<16x32xbf16, #tpu.memory_space<vmem>>, vector<16x32xbf16>
      tpu.vector_store %arg8[%c0_25, %c0_26], %43 {strides = array<i32>} : memref<16x32xbf16, #tpu.memory_space<vmem>>, vector<16x32xbf16>,
    } else {
    }
    return
  }
  func.func @transform_0(%arg0: i32, %arg1: i32) -> (i32, i32) {
    %c0_i32 = arith.constant 0 : i32
    return %arg0, %arg1 : i32, i32
  }
  func.func @transform_1(%arg0: i32, %arg1: i32) -> (i32, i32) {
    %c0_i32 = arith.constant 0 : i32
    %c0_i32_0 = arith.constant 0 : i32
    return %arg1, %c0_i32 : i32, i32
  }
  func.func @transform_2(%arg0: i32, %arg1: i32) -> (i32, i32) {
    %c0_i32 = arith.constant 0 : i32
    %c0_i32_0 = arith.constant 0 : i32
    %c0_i32_1 = arith.constant 0 : i32
    return %c0_i32, %c0_i32_0 : i32, i32
  }
  func.func @transform_3(%arg0: i32, %arg1: i32) -> (i32, i32) {
    %c0_i32 = arith.constant 0 : i32
    %c0_i32_0 = arith.constant 0 : i32
    return %arg0, %c0_i32 : i32, i32
  }
  func.func @transform_4(%arg0: i32, %arg1: i32) -> (i32, i32) {
    %c0_i32 = arith.constant 0 : i32
    %c0_i32_0 = arith.constant 0 : i32
    %c0_i32_1 = arith.constant 0 : i32
    return %c0_i32, %c0_i32_0 : i32, i32
  }
  func.func @transform_5(%arg0: i32, %arg1: i32) -> (i32, i32) {
    %c0_i32 = arith.constant 0 : i32
    %c0_i32_0 = arith.constant 0 : i32
    %c0_i32_1 = arith.constant 0 : i32
    return %c0_i32, %c0_i32_0 : i32, i32
  }
  func.func @transform_6(%arg0: i32, %arg1: i32) -> (i32, i32) {
    %c0_i32 = arith.constant 0 : i32
    %c0_i32_0 = arith.constant 0 : i32
    return %arg0, %c0_i32 : i32, i32
  }
}

module attributes {stable_mosaic.version = 11 : i64} {
  func.func @_linear_kernel(%arg0: i32, %arg1: i32, %arg2: i32, %arg3: memref<2x32xbf16, #tpu.memory_space<vmem>>, %arg4: memref<32x128xbf16, #tpu.memory_space<vmem>>, %arg5: memref<1x128xf32, #tpu.memory_space<vmem>>, %arg6: memref<2x128xf32, #tpu.memory_space<vmem>>, %arg7: memref<2x128xf32, #tpu.memory_space<vmem>>) attributes {dimension_semantics = [#tpu.dimension_semantics<parallel>, #tpu.dimension_semantics<parallel>, #tpu.dimension_semantics<arbitrary>], iteration_bounds = array<i64: 1, 1, 1>, scalar_prefetch = 0 : i64, scratch_operands = 1 : i64, tpu.core_type = #tpu.core_type<tc>, window_params = [{transform_indices = @transform_0, window_bounds = array<i64: 2, 32>}, {transform_indices = @transform_1, window_bounds = array<i64: 32, 128>}, {transform_indices = @transform_2, window_bounds = array<i64: 1, 128>}, {transform_indices = @transform_3, window_bounds = array<i64: 2, 128>}]} {
    %c0_i32 = arith.constant 0 : i32
    %0 = arith.cmpi eq, %arg2, %c0_i32 : i32
    %1 = arith.extui %0 : i1 to i32
    %c0_i32_0 = arith.constant 0 : i32
    %2 = arith.cmpi ne, %1, %c0_i32_0 : i32
    scf.if %2 {
      %cst_10 = arith.constant 0.000000e+00 : f32
      %12 = vector.broadcast %cst_10 : f32 to vector<2x128xf32>
      %c0_11 = arith.constant 0 : index
      %c0_12 = arith.constant 0 : index
      %13 = vector.load %arg7[%c0_11, %c0_12] : memref<2x128xf32, #tpu.memory_space<vmem>>, vector<2x128xf32>
      tpu.vector_store %arg7[%c0_11, %c0_12], %12 {strides = array<i32>} : memref<2x128xf32, #tpu.memory_space<vmem>>, vector<2x128xf32>,
    } else {
    }
    %c0 = arith.constant 0 : index
    %c0_1 = arith.constant 0 : index
    %3 = vector.load %arg7[%c0, %c0_1] : memref<2x128xf32, #tpu.memory_space<vmem>>, vector<2x128xf32>
    %c0_2 = arith.constant 0 : index
    %c0_3 = arith.constant 0 : index
    %4 = vector.load %arg3[%c0_2, %c0_3] : memref<2x32xbf16, #tpu.memory_space<vmem>>, vector<2x32xbf16>
    %c0_4 = arith.constant 0 : index
    %c0_5 = arith.constant 0 : index
    %5 = vector.load %arg4[%c0_4, %c0_5] : memref<32x128xbf16, #tpu.memory_space<vmem>>, vector<32x128xbf16>
    %cst = arith.constant dense<0.000000e+00> : vector<2x128xf32>
    %6 = tpu.matmul %4, %5, %cst {dimension_numbers = #tpu.dot_dimension_numbers<[1], [0], [0], [1], [0, 0, 1, 1], [], []>} : vector<2x32xbf16>, vector<32x128xbf16>, vector<2x128xf32> -> vector<2x128xf32>
    %7 = arith.addf %3, %6 : vector<2x128xf32>
    %c0_6 = arith.constant 0 : index
    %c0_7 = arith.constant 0 : index
    %8 = vector.load %arg7[%c0_6, %c0_7] : memref<2x128xf32, #tpu.memory_space<vmem>>, vector<2x128xf32>
    tpu.vector_store %arg7[%c0_6, %c0_7], %7 {strides = array<i32>} : memref<2x128xf32, #tpu.memory_space<vmem>>, vector<2x128xf32>,
    %c0_i32_8 = arith.constant 0 : i32
    %9 = arith.cmpi eq, %arg2, %c0_i32_8 : i32
    %10 = arith.extui %9 : i1 to i32
    %c0_i32_9 = arith.constant 0 : i32
    %11 = arith.cmpi ne, %10, %c0_i32_9 : i32
    scf.if %11 {
      %c0_10 = arith.constant 0 : index
      %c0_11 = arith.constant 0 : index
      %12 = vector.load %arg7[%c0_10, %c0_11] : memref<2x128xf32, #tpu.memory_space<vmem>>, vector<2x128xf32>
      %c0_12 = arith.constant 0 : index
      %c0_13 = arith.constant 0 : index
      %13 = vector.load %arg5[%c0_12, %c0_13] : memref<1x128xf32, #tpu.memory_space<vmem>>, vector<1x128xf32>
      %14 = vector.broadcast %13 : vector<1x128xf32> to vector<2x128xf32>
      %15 = arith.addf %12, %14 : vector<2x128xf32>
      %c0_14 = arith.constant 0 : index
      %c0_15 = arith.constant 0 : index
      %16 = vector.load %arg6[%c0_14, %c0_15] : memref<2x128xf32, #tpu.memory_space<vmem>>, vector<2x128xf32>
      tpu.vector_store %arg6[%c0_14, %c0_15], %15 {strides = array<i32>} : memref<2x128xf32, #tpu.memory_space<vmem>>, vector<2x128xf32>,
    } else {
    }
    return
  }
  func.func @transform_0(%arg0: i32, %arg1: i32, %arg2: i32) -> (i32, i32) {
    %c0_i32 = arith.constant 0 : i32
    return %arg0, %arg2 : i32, i32
  }
  func.func @transform_1(%arg0: i32, %arg1: i32, %arg2: i32) -> (i32, i32) {
    %c0_i32 = arith.constant 0 : i32
    return %arg2, %arg1 : i32, i32
  }
  func.func @transform_2(%arg0: i32, %arg1: i32, %arg2: i32) -> (i32, i32) {
    %c0_i32 = arith.constant 0 : i32
    %c0_i32_0 = arith.constant 0 : i32
    return %c0_i32, %arg1 : i32, i32
  }
  func.func @transform_3(%arg0: i32, %arg1: i32, %arg2: i32) -> (i32, i32) {
    %c0_i32 = arith.constant 0 : i32
    return %arg0, %arg1 : i32, i32
  }
}

</mosaic_0001>

<llo_original>
// kernel: classifier_forward.12
$region0: #{classifier_forward.12}
  #allocation0 [shape = 'u32[]', space=smem, size = 0x4, offset = 0x4, fixed_abs, tag = 'smem constant byte address 0x4 - core index']
  #allocation1 [shape = 'u32[144,128]{1,0:T(1,128)}', space=vmem, size = 0x12000, scoped, tag = 'internal scratch']
  %s0 = inlined_call_operand.vmem [shape: f32[16,32], index: 0, kind: input, shape index: {}]
  %s1 = inlined_call_operand.vmem [shape: f32[1,32], index: 1, kind: input, shape index: {}]
  %s2 = inlined_call_operand.vmem [shape: f32[1,32], index: 2, kind: input, shape index: {}]
  %s3 = inlined_call_operand.vmem [shape: bf16[16,32], index: 3, kind: output, shape index: {}]
  %s4 = sld [smem:[#allocation0]]
  $region22: #{classifier_forward.12} parent=0
    _
  %s6 = ssub.s32 1, %s4
  %s7 = scalar_select 0, %s6, %s4
  // Predicated region
  $region2: #{classifier_forward.12} parent=0 // pred_check
    _
  $region3: #{classifier_forward.12} parent=0 // pred_check_branch
    %9 = sbr.rel (0) target = $region5
  $region4: #{classifier_forward.12} parent=0 // pred_region
    _
  $region5: #{classifier_forward.12} parent=0 // pred_fallthru
    _
  // Predicated region
  $region6: #{classifier_forward.12} parent=0 // pred_check
    _
  $region7: #{classifier_forward.12} parent=0 // pred_check_branch
    %11 = sbr.rel (0) target = $region9
  $region8: #{classifier_forward.12} parent=0 // pred_region
    _
  $region9: #{classifier_forward.12} parent=0 // pred_fallthru
    _
  // Predicated region
  $region10: #{classifier_forward.12} parent=0 // pred_check
    _
  $region11: #{classifier_forward.12} parent=0 // pred_check_branch
    %13 = sbr.rel (0) target = $region13
  $region12: #{classifier_forward.12} parent=0 // pred_region
    _
  $region13: #{classifier_forward.12} parent=0 // pred_fallthru
    _
  %v14 = vld [vmem:[%s0] sm:$0xff]
  %v15 = vld [vmem:[%s0 + $0x8] sm:$0xff]
  %vm16 = vcmask 261120
  %v17 = vsel %vm16, %v14, 0.0
  %18 = vadd.xlane.f32.xlu0 %v17
  %v19 = vpop.xlane.xlu0 %18
  %v20 = vsel %vm16, %v15, 0.0
  %21 = vadd.xlane.f32.xlu0 %v20
  %v22 = vpop.xlane.xlu0 %21
  %v23 = vrcp.pop 32.0
  %v24 = vmul.f32 %v19, %v23
  %v25 = vmul.f32 %v22, %v23
  %v26 = vsub.f32 %v14, %v24
  %v27 = vsub.f32 %v15, %v25
  %v28 = vmul.f32 %v26, %v26
  %v29 = vmul.f32 %v27, %v27
  %v30 = vsel %vm16, %v28, 0.0
  %31 = vadd.xlane.f32.xlu0 %v30
  %v32 = vpop.xlane.xlu0 %31
  %v33 = vsel %vm16, %v29, 0.0
  %34 = vadd.xlane.f32.xlu0 %v33
  %v35 = vpop.xlane.xlu0 %34
  %v36 = vmul.f32 %v32, %v23
  %v37 = vmul.f32 %v35, %v23
  %v38 = vadd.f32 %v36, 1e-12
  %v39 = vadd.f32 %v37, 1e-12
  %v40 = vrsqrt.pop %v38
  %v41 = vrsqrt.pop %v39
  %v42 = vmul.f32 %v26, %v40
  %v43 = vmul.f32 %v27, %v41
  %v44 = vld [vmem:[%s1] sm:$0x1]
  %v46 = vlaneseq
  %v47 = vshrl.u32 %v46, 7
  %v48 = vsub.s32 0, %v47
  %v49 = vrot.slane %v44, %v48
  %v51 = vmul.f32 %v42, %v49
  %v52 = vmul.f32 %v43, %v49
  %v53 = vld [vmem:[%s2] sm:$0x1]
  %v55 = vlaneseq
  %v56 = vshrl.u32 %v55, 7
  %v57 = vsub.s32 0, %v56
  %v58 = vrot.slane %v53, %v57
  %v60 = vadd.f32 %v51, %v58
  %v61 = vadd.f32 %v52, %v58
  %v62 = vpack.c.bf16 %v61, %v60
  %v64 = vunpack.c.l.b16 %v62
  %v65 = vunpack.c.h.b16 %v62
  %v66 = vpack.c.b16 %v64, %v64
  %v67 = vpack.c.b16 %v65, %v65
  %vm70 = vcmask 257024
  %71 = vst.msk [vmem:[%s3] sm:$0xf] %vm70, %v66
  %72 = vst.msk [vmem:[%s3 + $0x4] sm:$0xf] %vm70, %v67
  // Predicated region
  $region14: #{classifier_forward.12} parent=0 // pred_check
    _
  $region15: #{classifier_forward.12} parent=0 // pred_check_branch
    %74 = sbr.rel (0) target = $region17
  $region16: #{classifier_forward.12} parent=0 // pred_region
    _
  $region17: #{classifier_forward.12} parent=0 // pred_fallthru
    _
  // Predicated region
  $region18: #{classifier_forward.12} parent=0 // pred_check
    _
  $region19: #{classifier_forward.12} parent=0 // pred_check_branch
    %76 = sbr.rel (0) target = $region21
  $region20: #{classifier_forward.12} parent=0 // pred_region
    _
  $region21: #{classifier_forward.12} parent=0 // pred_fallthru
    _

// kernel: classifier_forward.13
$region0: #{classifier_forward.13}
  #allocation0 [shape = 'u32[]', space=smem, size = 0x4, offset = 0x4, fixed_abs, tag = 'smem constant byte address 0x4 - core index']
  #allocation1 [shape = 'u32[144,128]{1,0:T(1,128)}', space=vmem, size = 0x12000, scoped, tag = 'internal scratch']
  #allocation2 [shape = 'f32[16,96]{1,0:T(8,128)}', space=vmem, size = 0x2000, scoped, tag = 'scratch operand']
  %s0 = inlined_call_operand.vmem [shape: bf16[16,32], index: 0, kind: input, shape index: {}]
  %s1 = inlined_call_operand.vmem [shape: bf16[32,96], index: 1, kind: input, shape index: {}]
  %s2 = inlined_call_operand.vmem [shape: f32[1,96], index: 2, kind: input, shape index: {}]
  %s3 = inlined_call_operand.vmem [shape: bf16[16,96], index: 3, kind: output, shape index: {}]
  %s4 = sld [smem:[#allocation0]]
  $region30: #{classifier_forward.13} parent=0
    _
  %s6 = ssub.s32 1, %s4
  %s7 = scalar_select 0, %s6, %s4
  // Predicated region
  $region2: #{classifier_forward.13} parent=0 // pred_check
    _
  $region3: #{classifier_forward.13} parent=0 // pred_check_branch
    %9 = sbr.rel (0) target = $region5
  $region4: #{classifier_forward.13} parent=0 // pred_region
    _
  $region5: #{classifier_forward.13} parent=0 // pred_fallthru
    _
  // Predicated region
  $region6: #{classifier_forward.13} parent=0 // pred_check
    _
  $region7: #{classifier_forward.13} parent=0 // pred_check_branch
    %11 = sbr.rel (0) target = $region9
  $region8: #{classifier_forward.13} parent=0 // pred_region
    _
  $region9: #{classifier_forward.13} parent=0 // pred_fallthru
    _
  // Predicated region
  $region10: #{classifier_forward.13} parent=0 // pred_check
    _
  $region11: #{classifier_forward.13} parent=0 // pred_check_branch
    %13 = sbr.rel (0) target = $region13
  $region12: #{classifier_forward.13} parent=0 // pred_region
    _
  $region13: #{classifier_forward.13} parent=0 // pred_fallthru
    _
  %p15 = scmp.eq.s32.totalorder 0, 0
  // Predicated region
  $region14: #{classifier_forward.13} parent=0 // pred_check
    %p16 = pneg %p15
  $region15: #{classifier_forward.13} parent=0 // pred_check_branch
    %18 = sbr.rel (%p16) target = $region17
  $region16: #{classifier_forward.13} parent=0 // pred_region
    %vm19 = vcmask 785408
    %20 = vst.msk [vmem:[#allocation2] sm:$0xff] %vm19, 0.0
    %21 = vst.msk [vmem:[#allocation2 + $0x8] sm:$0xff] %vm19, 0.0
  $region17: #{classifier_forward.13} parent=0 // pred_fallthru
    _
  %v22 = vld [vmem:[#allocation2] sm:$0xff]
  %v23 = vld [vmem:[#allocation2 + $0x8] sm:$0xff]
  %v24 = vld [vmem:[%s0] sm:$0xf]
  %v25 = vld [vmem:[%s0 + $0x4] sm:$0xf]
  %v26 = vld [vmem:[%s1] sm:$0xf]
  %v27 = vld [vmem:[%s1 + $0x4] sm:$0xf]
  %v28 = vld [vmem:[%s1 + $0x8] sm:$0xf]
  %v29 = vld [vmem:[%s1 + $0xc] sm:$0xf]
  %v32 = vunpack.c.l.b16 %v24
  %v33 = vunpack.c.l.b16 %v25
  %v34 = vpack.c.b16 %v33, %v32
  %v39 = vunpack.c.l.b16 %v26
  %v40 = vunpack.c.l.b16 %v27
  %v41 = vunpack.c.l.b16 %v28
  %v42 = vunpack.c.l.b16 %v29
  %v43 = vpack.c.b16 %v40, %v39
  %v44 = vpack.c.b16 %v42, %v41
  %vm47 = vcmask 261120
  %v49 = vsel %vm47, %v34, 0
  %51 = vmatprep.subr.bf16.mxu0 0
  %52 = vmatpush1.bf16.msra.mxu0 0
  %53 = vmatprep.subr.bf16.mxu0 0
  %54 = vmatpush1.bf16.msra.mxu0 0
  %55 = vmatprep.subr.bf16.mxu0 0
  %56 = vmatpush1.bf16.msra.mxu0 0
  %57 = vmatprep.subr.bf16.mxu0 0
  %58 = vmatpush1.bf16.msra.mxu0 0
  %59 = vmatprep.subr.bf16.mxu0 0
  %60 = vmatpush1.bf16.msra.mxu0 0
  %61 = vmatprep.subr.bf16.mxu0 0
  %62 = vmatpush1.bf16.msra.mxu0 0
  %63 = vmatprep.subr.bf16.mxu0 0
  %64 = vmatpush1.bf16.msra.mxu0 %v44
  %65 = vmatprep.subr.bf16.mxu0 0
  %66 = vmatpush1.bf16.msra.mxu0 %v43
  %67 = vmatprep.subr.bf16.mxu0 0
  %68 = vmatpush2.bf16.msra.mxu0 0
  %69 = vmatprep.subr.bf16.mxu0 0
  %70 = vmatpush2.bf16.msra.mxu0 0
  %71 = vmatprep.subr.bf16.mxu0 0
  %72 = vmatpush2.bf16.msra.mxu0 0
  %73 = vmatprep.subr.bf16.mxu0 0
  %74 = vmatpush2.bf16.msra.mxu0 0
  %75 = vmatprep.subr.bf16.mxu0 0
  %76 = vmatpush2.bf16.msra.mxu0 0
  %77 = vmatprep.subr.bf16.mxu0 0
  %78 = vmatpush2.bf16.msra.mxu0 0
  %79 = vmatprep.subr.bf16.mxu0 0
  %80 = vmatpush2.bf16.msra.mxu0 0
  %81 = vmatprep.subr.bf16.mxu0 0
  %82 = vmatpush2.bf16.msra.mxu0 0
  %83 = vmatprep.mubr.bf16.mxu0 0
  %84 = vmatmul.mubr.bf16.gmra.mxu0 %v49
  %v85 = vpop.f32.mrf.mxu0
  %v86 = vadd.f32 0.0, %v85
  %v87 = vpop.f32.mrf.mxu0
  %v88 = vpop.f32.mrf.mxu0
  %v89 = vadd.f32 0.0, %v88
  %v90 = vpop.f32.mrf.mxu0
  %91 = vdwg.mxu0
  %v92 = vadd.f32 %v22, %v86
  %v93 = vadd.f32 %v23, %v89
  %vm94 = vcmask 785408
  %95 = vst.msk [vmem:[#allocation2] sm:$0xff] %vm94, %v92
  %96 = vst.msk [vmem:[#allocation2 + $0x8] sm:$0xff] %vm94, %v93
  // Predicated region
  $region18: #{classifier_forward.13} parent=0 // pred_check
    %p97 = pneg %p15
  $region19: #{classifier_forward.13} parent=0 // pred_check_branch
    %99 = sbr.rel (%p97) target = $region21
  $region20: #{classifier_forward.13} parent=0 // pred_region
    %v100 = vld [vmem:[#allocation2] sm:$0xff]
    %v101 = vld [vmem:[#allocation2 + $0x8] sm:$0xff]
    %v102 = vld [vmem:[%s2] sm:$0x1]
    %v104 = vlaneseq
    %v105 = vshrl.u32 %v104, 7
    %v106 = vsub.s32 0, %v105
    %v107 = vrot.slane %v102, %v106
    %v109 = vadd.f32 %v100, %v107
    %v110 = vadd.f32 %v101, %v107
    %v111 = vpack.c.bf16 %v110, %v109
    %v113 = vunpack.c.l.b16 %v111
    %v114 = vunpack.c.h.b16 %v111
    %v115 = vpack.c.b16 %v113, %v113
    %v116 = vpack.c.b16 %v114, %v114
    %vm119 = vcmask 781312
    %120 = vst.msk [vmem:[%s3] sm:$0xf] %vm119, %v115
    %121 = vst.msk [vmem:[%s3 + $0x4] sm:$0xf] %vm119, %v116
  $region21: #{classifier_forward.13} parent=0 // pred_fallthru
    _
  // Predicated region
  $region22: #{classifier_forward.13} parent=0 // pred_check
    _
  $region23: #{classifier_forward.13} parent=0 // pred_check_branch
    %123 = sbr.rel (0) target = $region25
  $region24: #{classifier_forward.13} parent=0 // pred_region
    _
  $region25: #{classifier_forward.13} parent=0 // pred_fallthru
    _
  // Predicated region
  $region26: #{classifier_forward.13} parent=0 // pred_check
    _
  $region27: #{classifier_forward.13} parent=0 // pred_check_branch
    %125 = sbr.rel (0) target = $region29
  $region28: #{classifier_forward.13} parent=0 // pred_region
    _
  $region29: #{classifier_forward.13} parent=0 // pred_fallthru
    _

// kernel: classifier_forward.14
$region0: #{classifier_forward.14}
  #allocation0 [shape = 'u32[]', space=smem, size = 0x4, offset = 0x4, fixed_abs, tag = 'smem constant byte address 0x4 - core index']
  #allocation1 [shape = 'u32[144,128]{1,0:T(1,128)}', space=vmem, size = 0x12000, scoped, tag = 'internal scratch']
  %s0 = inlined_call_operand.vmem [shape: bf16[2,2,8,16], index: 0, kind: input, shape index: {}]
  %s1 = inlined_call_operand.vmem [shape: bf16[2,2,16,8], index: 1, kind: input, shape index: {}]
  %s2 = inlined_call_operand.vmem [shape: bf16[2,2,8,16], index: 2, kind: input, shape index: {}]
  %s3 = inlined_call_operand.vmem [shape: f32[2,1,8], index: 3, kind: input, shape index: {}]
  %s4 = inlined_call_operand.vmem [shape: bf16[2,2,8,16], index: 4, kind: output, shape index: {}]
  %s5 = sld [smem:[#allocation0]]
  $region49: #{classifier_forward.14} parent=0
    _
  %s7 = ssub.s32 1, %s5
  %s8 = scalar_select 0, %s7, %s5
  loop: start=0, step=1, limit=6
  $region2: #{classifier_forward.14} parent=0 // loop_pre_header
    _
  $region3: #{classifier_forward.14} parent=0 // loop_header
    %s10 = sphi 0, %s14
    %p11 = scmp.ge.s32.totalorder %s10, 6
    %s17 = sphi 0, %s36
    %s18 = sphi 0, %s32
    %s19 = sphi 0, %s28
    %s20 = sphi 0, %s17
    %s21 = sphi 0, %s18
    %s22 = sphi 0, %s19
    %s23 = sphi 0, %s20
    %s24 = sphi 0, %s21
    %s25 = sphi 0, %s22
    %s43 = sphi 0, %s45
    %s46 = sphi 0, %s43
    %s47 = sphi 0, %s46
    %s63 = sphi 0, %s47
    %s71 = sphi 0, %s73
    %s74 = sphi 0, %s71
    %s75 = sphi 0, %s74
    %s91 = sphi 0, %s75
    %s99 = sphi 0, %s101
    %s102 = sphi 0, %s99
    %s103 = sphi 0, %s102
    %s119 = sphi 0, %s103
    %s125 = sphi 0, %s127
    %s128 = sphi 0, %s125
    %s129 = sphi 0, %s128
    %s145 = sphi 0, %s129
    %s155 = sphi 0, %s157
    %s158 = sphi 0, %s155
    %s159 = sphi 0, %s158
    %s175 = sphi 0, %s159
  $region4: #{classifier_forward.14} parent=0 // loop_header_branch
    %13 = sbr.rel (%p11) target = $region8
  $region5: #{classifier_forward.14} parent=0 // loop_body
    %s15 = ssub.s32 %s10, 1
    %s16 = ssub.s32 %s10, 2
    %s26 = sadd.s32 1, %s19
    %p27 = scmp.ge.s32.totalorder %s26, 1
    %s28 = scalar_select %p27, 0, %s26
    %s29 = sadd.s32 1, %s18
    %s30 = scalar_select %p27, %s29, %s18
    %p31 = scmp.ge.s32.totalorder %s30, 2
    %s32 = scalar_select %p31, 0, %s30
    %s33 = sadd.s32 1, %s17
    %s34 = scalar_select %p31, %s33, %s17
    %p35 = scmp.ge.s32.totalorder %s34, 2
    %s36 = scalar_select %p35, 0, %s34
    %s37 = ssub.s32 %s17, %s36
    %s38 = ssub.s32 %s18, %s32
    %s39 = sor.u32 %s37, %s38
    %s40 = ssub.s32 %s19, %s28
    %s41 = sor.u32 %s39, %s40
    %p42 = scmp.eq.s32.totalorder %s41, 0
    %s44 = sadd.s32 %s43, 1
    %s45 = scalar_select %p42, %s43, %s44
    %p48 = pneg %p42
    %p49 = scmp.eq.s32.totalorder %s10, 3
    %p50 = por %p48, %p49
    %p51 = scmp.ne.s32.totalorder %s43, %s46
    %p52 = scmp.eq.s32.totalorder %s10, 0
    %p53 = por %p51, %p52
    %p54 = scmp.ne.s32.totalorder %s43, %s46
    %p55 = scmp.eq.s32.totalorder %s15, 3
    %p56 = por %p54, %p55
    %p57 = scmp.ne.s32.totalorder %s46, %s47
    %p58 = scmp.eq.s32.totalorder %s15, 0
    %p59 = por %p57, %p58
    %p60 = scmp.ne.s32.totalorder %s46, %s47
    %p61 = scmp.eq.s32.totalorder %s16, 3
    %p62 = por %p60, %p61
    %p64 = scmp.ne.s32.totalorder %s47, %s63
    %p65 = scmp.eq.s32.totalorder %s16, 0
    %p66 = por %p64, %p65
    %s67 = ssub.s32 %s17, %s36
    %s68 = ssub.s32 %s18, %s32
    %s69 = sor.u32 %s67, %s68
    %p70 = scmp.eq.s32.totalorder %s69, 0
    %s72 = sadd.s32 %s71, 1
    %s73 = scalar_select %p70, %s71, %s72
    %p76 = pneg %p70
    %p77 = scmp.eq.s32.totalorder %s10, 3
    %p78 = por %p76, %p77
    %p79 = scmp.ne.s32.totalorder %s71, %s74
    %p80 = scmp.eq.s32.totalorder %s10, 0
    %p81 = por %p79, %p80
    %p82 = scmp.ne.s32.totalorder %s71, %s74
    %p83 = scmp.eq.s32.totalorder %s15, 3
    %p84 = por %p82, %p83
    %p85 = scmp.ne.s32.totalorder %s74, %s75
    %p86 = scmp.eq.s32.totalorder %s15, 0
    %p87 = por %p85, %p86
    %p88 = scmp.ne.s32.totalorder %s74, %s75
    %p89 = scmp.eq.s32.totalorder %s16, 3
    %p90 = por %p88, %p89
    %p92 = scmp.ne.s32.totalorder %s75, %s91
    %p93 = scmp.eq.s32.totalorder %s16, 0
    %p94 = por %p92, %p93
    %s95 = ssub.s32 %s17, %s36
    %s96 = ssub.s32 %s18, %s32
    %s97 = sor.u32 %s95, %s96
    %p98 = scmp.eq.s32.totalorder %s97, 0
    %s100 = sadd.s32 %s99, 1
    %s101 = scalar_select %p98, %s99, %s100
    %p104 = pneg %p98
    %p105 = scmp.eq.s32.totalorder %s10, 3
    %p106 = por %p104, %p105
    %p107 = scmp.ne.s32.totalorder %s99, %s102
    %p108 = scmp.eq.s32.totalorder %s10, 0
    %p109 = por %p107, %p108
    %p110 = scmp.ne.s32.totalorder %s99, %s102
    %p111 = scmp.eq.s32.totalorder %s15, 3
    %p112 = por %p110, %p111
    %p113 = scmp.ne.s32.totalorder %s102, %s103
    %p114 = scmp.eq.s32.totalorder %s15, 0
    %p115 = por %p113, %p114
    %p116 = scmp.ne.s32.totalorder %s102, %s103
    %p117 = scmp.eq.s32.totalorder %s16, 3
    %p118 = por %p116, %p117
    %p120 = scmp.ne.s32.totalorder %s103, %s119
    %p121 = scmp.eq.s32.totalorder %s16, 0
    %p122 = por %p120, %p121
    %s123 = ssub.s32 %s17, %s36
    %p124 = scmp.eq.s32.totalorder %s123, 0
    %s126 = sadd.s32 %s125, 1
    %s127 = scalar_select %p124, %s125, %s126
    %p130 = pneg %p124
    %p131 = scmp.eq.s32.totalorder %s10, 3
    %p132 = por %p130, %p131
    %p133 = scmp.ne.s32.totalorder %s125, %s128
    %p134 = scmp.eq.s32.totalorder %s10, 0
    %p135 = por %p133, %p134
    %p136 = scmp.ne.s32.totalorder %s125, %s128
    %p137 = scmp.eq.s32.totalorder %s15, 3
    %p138 = por %p136, %p137
    %p139 = scmp.ne.s32.totalorder %s128, %s129
    %p140 = scmp.eq.s32.totalorder %s15, 0
    %p141 = por %p139, %p140
    %p142 = scmp.ne.s32.totalorder %s128, %s129
    %p143 = scmp.eq.s32.totalorder %s16, 3
    %p144 = por %p142, %p143
    %p146 = scmp.ne.s32.totalorder %s129, %s145
    %p147 = scmp.eq.s32.totalorder %s16, 0
    %p148 = por %p146, %p147
    %s149 = ssub.s32 %s17, %s36
    %s150 = ssub.s32 %s18, %s32
    %s151 = sor.u32 %s149, %s150
    %s152 = ssub.s32 %s19, %s28
    %s153 = sor.u32 %s151, %s152
    %p154 = scmp.eq.s32.totalorder %s153, 0
    %s156 = sadd.s32 %s155, 1
    %s157 = scalar_select %p154, %s155, %s156
    %p160 = pneg %p154
    %p161 = scmp.eq.s32.totalorder %s10, 3
    %p162 = por %p160, %p161
    %p163 = scmp.ne.s32.totalorder %s155, %s158
    %p164 = scmp.eq.s32.totalorder %s10, 0
    %p165 = por %p163, %p164
    %p166 = scmp.ne.s32.totalorder %s155, %s158
    %p167 = scmp.eq.s32.totalorder %s15, 3
    %p168 = por %p166, %p167
    %p169 = scmp.ne.s32.totalorder %s158, %s159
    %p170 = scmp.eq.s32.totalorder %s15, 0
    %p171 = por %p169, %p170
    %p172 = scmp.ne.s32.totalorder %s158, %s159
    %p173 = scmp.eq.s32.totalorder %s16, 3
    %p174 = por %p172, %p173
    %p176 = scmp.ne.s32.totalorder %s159, %s175
    %p177 = scmp.eq.s32.totalorder %s16, 0
    %p178 = por %p176, %p177
    %p179 = scmp.le.s32.totalorder 1, %s10
    %p180 = scmp.lt.s32.totalorder %s10, 5
    %p181 = pnand %p179, %p180
    %p182 = pneg %p181
    // Predicated region
    $region9: #{classifier_forward.14} parent=5 // pred_check
      _
    $region10: #{classifier_forward.14} parent=5 // pred_check_branch
      %184 = sbr.rel (%p181) target = $region12
    $region11: #{classifier_forward.14} parent=5 // pred_region
      %s185 = ssub.s32 %s10, 1
    $region12: #{classifier_forward.14} parent=5 // pred_fallthru
      _
    %p186 = scmp.lt.s32.totalorder %s10, 4
    // Predicated region
    $region13: #{classifier_forward.14} parent=5 // pred_check
      %p187 = pneg %p186
    $region14: #{classifier_forward.14} parent=5 // pred_check_branch
      %189 = sbr.rel (%p187) target = $region16
    $region15: #{classifier_forward.14} parent=5 // pred_region
      // Predicated region
      $region17: #{classifier_forward.14} parent=15 // pred_check
        %p190 = pneg %p53
      $region18: #{classifier_forward.14} parent=15 // pred_check_branch
        %192 = sbr.rel (%p190) target = $region20
      $region19: #{classifier_forward.14} parent=15 // pred_region
        %p193 = scmp.lt.s32.totalorder %s17, 1
        %s194 = scalar_select %p193, %s17, 1
        %p195 = scmp.lt.s32.totalorder %s18, 1
        %s196 = scalar_select %p195, %s18, 1
        %p197 = scmp.lt.s32.totalorder %s19, 0
        %s198 = scalar_select %p197, %s19, 0
        %s199 = sadd.s32 %s198, %s196
        %s200 = smul.addr %s194, 2
        %s201 = sadd.s32 %s199, %s200
        %s202 = smul.addr %s201, 4
        %s203 = scalar_lea.vmem %s0, %s202
      $region20: #{classifier_forward.14} parent=15 // pred_fallthru
        _
      // Predicated region
      $region21: #{classifier_forward.14} parent=15 // pred_check
        %p204 = pneg %p81
      $region22: #{classifier_forward.14} parent=15 // pred_check_branch
        %206 = sbr.rel (%p204) target = $region24
      $region23: #{classifier_forward.14} parent=15 // pred_region
        %p207 = scmp.lt.s32.totalorder %s17, 1
        %s208 = scalar_select %p207, %s17, 1
        %p209 = scmp.lt.s32.totalorder %s18, 1
        %s210 = scalar_select %p209, %s18, 1
        %s211 = smul.addr %s210, 2
        %s212 = smul.addr %s208, 4
        %s213 = sadd.s32 %s211, %s212
        %s214 = smul.addr %s213, 4
        %s215 = scalar_lea.vmem %s1, %s214
      $region24: #{classifier_forward.14} parent=15 // pred_fallthru
        _
      // Predicated region
      $region25: #{classifier_forward.14} parent=15 // pred_check
        %p216 = pneg %p109
      $region26: #{classifier_forward.14} parent=15 // pred_check_branch
        %218 = sbr.rel (%p216) target = $region28
      $region27: #{classifier_forward.14} parent=15 // pred_region
        %p219 = scmp.lt.s32.totalorder %s17, 1
        %s220 = scalar_select %p219, %s17, 1
        %p221 = scmp.lt.s32.totalorder %s18, 1
        %s222 = scalar_select %p221, %s18, 1
        %s223 = smul.addr %s220, 2
        %s224 = sadd.s32 %s222, %s223
        %s225 = smul.addr %s224, 4
        %s226 = scalar_lea.vmem %s2, %s225
      $region28: #{classifier_forward.14} parent=15 // pred_fallthru
        _
      // Predicated region
      $region29: #{classifier_forward.14} parent=15 // pred_check
        %p227 = pneg %p135
      $region30: #{classifier_forward.14} parent=15 // pred_check_branch
        %229 = sbr.rel (%p227) target = $region32
      $region31: #{classifier_forward.14} parent=15 // pred_region
        %p230 = scmp.lt.s32.totalorder %s17, 1
        %s231 = scalar_select %p230, %s17, 1
        %s232 = scalar_lea.vmem %s3, %s231
      $region32: #{classifier_forward.14} parent=15 // pred_fallthru
        _
    $region16: #{classifier_forward.14} parent=5 // pred_fallthru
      _
    %p233 = scmp.le.s32.totalorder 1, %s10
    %p234 = scmp.lt.s32.totalorder %s10, 5
    %p235 = pnand %p233, %p234
    %p236 = pneg %p235
    // Predicated region
    $region33: #{classifier_forward.14} parent=5 // pred_check
      _
    $region34: #{classifier_forward.14} parent=5 // pred_check_branch
      %238 = sbr.rel (%p235) target = $region36
    $region35: #{classifier_forward.14} parent=5 // pred_region
      %s239 = ssub.s32 %s10, 1
      %p240 = scmp.lt.s32.totalorder %s20, 1
      %s241 = scalar_select %p240, %s20, 1
      %p242 = scmp.lt.s32.totalorder %s21, 1
      %s243 = scalar_select %p242, %s21, 1
      %p244 = scmp.lt.s32.totalorder %s22, 0
      %s245 = scalar_select %p244, %s22, 0
      %s246 = sadd.s32 %s245, %s243
      %s247 = smul.addr %s241, 2
      %s248 = sadd.s32 %s246, %s247
      %s249 = smul.addr %s248, 4
      %s250 = scalar_lea.vmem %s0, %s249
      %p251 = pneg %p59
      %p252 = pneg %p56
      %p253 = scmp.lt.s32.totalorder %s20, 1
      %s254 = scalar_select %p253, %s20, 1
      %p255 = scmp.lt.s32.totalorder %s21, 1
      %s256 = scalar_select %p255, %s21, 1
      %s257 = smul.addr %s256, 2
      %s258 = smul.addr %s254, 4
      %s259 = sadd.s32 %s257, %s258
      %s260 = smul.addr %s259, 4
      %s261 = scalar_lea.vmem %s1, %s260
      %p262 = pneg %p87
      %p263 = pneg %p84
      %p264 = scmp.lt.s32.totalorder %s20, 1
      %s265 = scalar_select %p264, %s20, 1
      %p266 = scmp.lt.s32.totalorder %s21, 1
      %s267 = scalar_select %p266, %s21, 1
      %s268 = smul.addr %s265, 2
      %s269 = sadd.s32 %s267, %s268
      %s270 = smul.addr %s269, 4
      %s271 = scalar_lea.vmem %s2, %s270
      %p272 = pneg %p115
      %p273 = pneg %p112
      %p274 = scmp.lt.s32.totalorder %s20, 1
      %s275 = scalar_select %p274, %s20, 1
      %s276 = scalar_lea.vmem %s3, %s275
      %p277 = pneg %p141
      %p278 = pneg %p138
      %p279 = pneg %p171
      %p280 = pneg %p168
      %p281 = scmp.lt.s32.totalorder %s20, 1
      %s282 = scalar_select %p281, %s20, 1
      %p283 = scmp.lt.s32.totalorder %s21, 1
      %s284 = scalar_select %p283, %s21, 1
      %p285 = scmp.lt.s32.totalorder %s22, 0
      %s286 = scalar_select %p285, %s22, 0
      %s287 = sadd.s32 %s286, %s284
      %s288 = smul.addr %s282, 2
      %s289 = sadd.s32 %s287, %s288
      %s290 = smul.addr %s289, 4
      %s291 = scalar_lea.vmem %s4, %s290
      %p292 = scmp.lt.s32.totalorder %s20, 1
      %s293 = scalar_select %p292, %s20, 1
      %p294 = scmp.lt.s32.totalorder %s21, 1
      %s295 = scalar_select %p294, %s21, 1
      %p296 = scmp.lt.s32.totalorder %s22, 0
      %s297 = scalar_select %p296, %s22, 0
      %s298 = sadd.s32 %s297, %s295
      %s299 = smul.addr %s293, 2
      %s300 = sadd.s32 %s298, %s299
      %s301 = smul.addr %s300, 4
      %s302 = scalar_lea.vmem %s0, %s301
      %p303 = scmp.lt.s32.totalorder %s20, 1
      %s304 = scalar_select %p303, %s20, 1
      %p305 = scmp.lt.s32.totalorder %s21, 1
      %s306 = scalar_select %p305, %s21, 1
      %s307 = smul.addr %s306, 2
      %s308 = smul.addr %s304, 4
      %s309 = sadd.s32 %s307, %s308
      %s310 = smul.addr %s309, 4
      %s311 = scalar_lea.vmem %s1, %s310
      %p312 = scmp.lt.s32.totalorder %s20, 1
      %s313 = scalar_select %p312, %s20, 1
      %p314 = scmp.lt.s32.totalorder %s21, 1
      %s315 = scalar_select %p314, %s21, 1
      %s316 = smul.addr %s313, 2
      %s317 = sadd.s32 %s315, %s316
      %s318 = smul.addr %s317, 4
      %s319 = scalar_lea.vmem %s2, %s318
      %p320 = scmp.lt.s32.totalorder %s20, 1
      %s321 = scalar_select %p320, %s20, 1
      %s322 = scalar_lea.vmem %s3, %s321
      %p323 = scmp.lt.s32.totalorder %s20, 1
      %s324 = scalar_select %p323, %s20, 1
      %p325 = scmp.lt.s32.totalorder %s21, 1
      %s326 = scalar_select %p325, %s21, 1
      %p327 = scmp.lt.s32.totalorder %s22, 0
      %s328 = scalar_select %p327, %s22, 0
      %s329 = sadd.s32 %s328, %s326
      %s330 = smul.addr %s324, 2
      %s331 = sadd.s32 %s329, %s330
      %s332 = smul.addr %s331, 4
      %s333 = scalar_lea.vmem %s4, %s332
      %v336 = vld [vmem:[%s302] sm:$0xf]
      %v337 = vmul.bf16 %v336, 1048592000
      %v338 = vld [vmem:[%s311] sm:$0xf]
      %v339 = vld [vmem:[%s311 + $0x4] sm:$0xf]
      %v340 = vld [vmem:[%s322] sm:$0x1]
      %v342 = vlaneseq
      %v343 = vshrl.u32 %v342, 7
      %v344 = vsub.s32 0, %v343
      %v345 = vrot.slane %v340, %v344
      %v349 = vunpack.c.l.b16 %v338
      %v350 = vunpack.c.l.b16 %v339
      %v351 = vpack.c.b16 %v350, %v349
      %vm353 = vcmask 130048
      %v355 = vsel %vm353, %v337, 0
      %357 = vmatprep.subr.bf16.mxu0 0
      %358 = vmatpush1.bf16.msra.mxu0 0
      %359 = vmatprep.subr.bf16.mxu0 0
      %360 = vmatpush1.bf16.msra.mxu0 0
      %361 = vmatprep.subr.bf16.mxu0 0
      %362 = vmatpush1.bf16.msra.mxu0 0
      %363 = vmatprep.subr.bf16.mxu0 0
      %364 = vmatpush1.bf16.msra.mxu0 0
      %365 = vmatprep.subr.bf16.mxu0 0
      %366 = vmatpush1.bf16.msra.mxu0 0
      %367 = vmatprep.subr.bf16.mxu0 0
      %368 = vmatpush1.bf16.msra.mxu0 0
      %369 = vmatprep.subr.bf16.mxu0 0
      %370 = vmatpush1.bf16.msra.mxu0 0
      %371 = vmatprep.subr.bf16.mxu0 0
      %372 = vmatpush1.bf16.msra.mxu0 %v351
      %373 = vmatprep.subr.bf16.mxu0 0
      %374 = vmatpush2.bf16.msra.mxu0 0
      %375 = vmatprep.subr.bf16.mxu0 0
      %376 = vmatpush2.bf16.msra.mxu0 0
      %377 = vmatprep.subr.bf16.mxu0 0
      %378 = vmatpush2.bf16.msra.mxu0 0
      %379 = vmatprep.subr.bf16.mxu0 0
      %380 = vmatpush2.bf16.msra.mxu0 0
      %381 = vmatprep.subr.bf16.mxu0 0
      %382 = vmatpush2.bf16.msra.mxu0 0
      %383 = vmatprep.subr.bf16.mxu0 0
      %384 = vmatpush2.bf16.msra.mxu0 0
      %385 = vmatprep.subr.bf16.mxu0 0
      %386 = vmatpush2.bf16.msra.mxu0 0
      %387 = vmatprep.subr.bf16.mxu0 0
      %388 = vmatpush2.bf16.msra.mxu0 0
      %389 = vmatprep.mubr.bf16.mxu0 0
      %390 = vmatmul.mubr.bf16.gmra.mxu0 %v355
      %v391 = vpop.f32.mrf.mxu0
      %v392 = vadd.f32 %v345, %v391
      %v393 = vpop.f32.mrf.mxu0
      %v394 = vpop.f32.mrf.mxu0
      %v395 = vpop.f32.mrf.mxu0
      %396 = vdwg.mxu0
      %vm397 = vcmask 64512
      %v398 = vsel %vm397, %v392, -inf
      %399 = vmax.xlane.f32.xlu0 %v398
      %v400 = vpop.xlane.xlu0 %399
      %v401 = vsub.f32 %v392, %v400
      %v402 = vmul.f32 %v401, 1.442695
      %v403 = vpow.pop %v402
      %v404 = vsel %vm397, %v403, 0.0
      %405 = vadd.xlane.f32.xlu0 %v404
      %v406 = vpop.xlane.xlu0 %405
      %v407 = vrcp.pop %v406
      %v408 = vmul.f32 %v403, %v407
      %v409 = vpack.c.bf16 %v408, %v408
      %v410 = vld [vmem:[%s319] sm:$0xf]
      %v412 = vsel %vm397, %v409, 0
      %vm414 = vcmask 1043456
      %v416 = vsel %vm414, %v410, 0
      %418 = vmatprep.subr.bf16.mxu0 0
      %419 = vmatpush1.bf16.msra.mxu0 0
      %420 = vmatprep.subr.bf16.mxu0 0
      %421 = vmatpush1.bf16.msra.mxu0 0
      %422 = vmatprep.subr.bf16.mxu0 0
      %423 = vmatpush1.bf16.msra.mxu0 0
      %424 = vmatprep.subr.bf16.mxu0 0
      %425 = vmatpush1.bf16.msra.mxu0 0
      %426 = vmatprep.subr.bf16.mxu0 0
      %427 = vmatpush1.bf16.msra.mxu0 0
      %428 = vmatprep.subr.bf16.mxu0 0
      %429 = vmatpush1.bf16.msra.mxu0 0
      %430 = vmatprep.subr.bf16.mxu0 0
      %431 = vmatpush1.bf16.msra.mxu0 0
      %432 = vmatprep.subr.bf16.mxu0 0
      %433 = vmatpush1.bf16.msra.mxu0 %v416
      %434 = vmatprep.subr.bf16.mxu0 0
      %435 = vmatpush2.bf16.msra.mxu0 0
      %436 = vmatprep.subr.bf16.mxu0 0
      %437 = vmatpush2.bf16.msra.mxu0 0
      %438 = vmatprep.subr.bf16.mxu0 0
      %439 = vmatpush2.bf16.msra.mxu0 0
      %440 = vmatprep.subr.bf16.mxu0 0
      %441 = vmatpush2.bf16.msra.mxu0 0
      %442 = vmatprep.subr.bf16.mxu0 0
      %443 = vmatpush2.bf16.msra.mxu0 0
      %444 = vmatprep.subr.bf16.mxu0 0
      %445 = vmatpush2.bf16.msra.mxu0 0
      %446 = vmatprep.subr.bf16.mxu0 0
      %447 = vmatpush2.bf16.msra.mxu0 0
      %448 = vmatprep.subr.bf16.mxu0 0
      %449 = vmatpush2.bf16.msra.mxu0 0
      %450 = vmatprep.mubr.bf16.mxu0 0
      %451 = vmatmul.mubr.bf16.gmra.mxu0 %v412
      %v452 = vpop.f32.mrf.mxu0
      %v453 = vadd.f32 0.0, %v452
      %v454 = vpop.f32.mrf.mxu0
      %v455 = vpop.f32.mrf.mxu0
      %v456 = vpop.f32.mrf.mxu0
      %457 = vdwg.mxu0
      %v458 = vpack.c.bf16 %v453, %v453
      %vm459 = vcmask 125952
      %460 = vst.msk [vmem:[%s333] sm:$0xf] %vm459, %v458
      %p461 = scmp.lt.s32.totalorder %s20, 1
      %s462 = scalar_select %p461, %s20, 1
      %p463 = scmp.lt.s32.totalorder %s21, 1
      %s464 = scalar_select %p463, %s21, 1
      %p465 = scmp.lt.s32.totalorder %s22, 0
      %s466 = scalar_select %p465, %s22, 0
      %s467 = sadd.s32 %s466, %s464
      %s468 = smul.addr %s462, 2
      %s469 = sadd.s32 %s467, %s468
      %s470 = smul.addr %s469, 4
      %s471 = scalar_lea.vmem %s4, %s470
      // Predicated region
      $region37: #{classifier_forward.14} parent=35 // pred_check
        %p472 = pneg %p168
      $region38: #{classifier_forward.14} parent=35 // pred_check_branch
        %474 = sbr.rel (%p472) target = $region40
      $region39: #{classifier_forward.14} parent=35 // pred_region
        _
      $region40: #{classifier_forward.14} parent=35 // pred_fallthru
        _
    $region36: #{classifier_forward.14} parent=5 // pred_fallthru
      _
    %p475 = scmp.le.s32.totalorder 2, %s10
    // Predicated region
    $region41: #{classifier_forward.14} parent=5 // pred_check
      %p476 = pneg %p475
    $region42: #{classifier_forward.14} parent=5 // pred_check_branch
      %478 = sbr.rel (%p476) target = $region44
    $region43: #{classifier_forward.14} parent=5 // pred_region
      %s479 = ssub.s32 %s10, 2
      // Predicated region
      $region45: #{classifier_forward.14} parent=43 // pred_check
        %p480 = pneg %p174
      $region46: #{classifier_forward.14} parent=43 // pred_check_branch
        %482 = sbr.rel (%p480) target = $region48
      $region47: #{classifier_forward.14} parent=43 // pred_region
        %p483 = scmp.lt.s32.totalorder %s23, 1
        %s484 = scalar_select %p483, %s23, 1
        %p485 = scmp.lt.s32.totalorder %s24, 1
        %s486 = scalar_select %p485, %s24, 1
        %p487 = scmp.lt.s32.totalorder %s25, 0
        %s488 = scalar_select %p487, %s25, 0
        %s489 = sadd.s32 %s488, %s486
        %s490 = smul.addr %s484, 2
        %s491 = sadd.s32 %s489, %s490
        %s492 = smul.addr %s491, 4
        %s493 = scalar_lea.vmem %s4, %s492
      $region48: #{classifier_forward.14} parent=43 // pred_fallthru
        _
    $region44: #{classifier_forward.14} parent=5 // pred_fallthru
      _
  $region6: #{classifier_forward.14} parent=0 // loop_footer
    %s14 = sadd.s32 1, %s10
  $region7: #{classifier_forward.14} parent=0 // loop_footer_branch
    %9 = sbr.rel target = $region3
  $region8: #{classifier_forward.14} parent=0 // loop_exit
    _

// kernel: classifier_forward.15
$region0: #{classifier_forward.15}
  #allocation0 [shape = 'u32[]', space=smem, size = 0x4, offset = 0x4, fixed_abs, tag = 'smem constant byte address 0x4 - core index']
  #allocation1 [shape = 'u32[144,128]{1,0:T(1,128)}', space=vmem, size = 0x12000, scoped, tag = 'internal scratch']
  #allocation2 [shape = 'f32[16,32]{1,0:T(8,128)}', space=vmem, size = 0x2000, scoped, tag = 'scratch operand']
  %s0 = inlined_call_operand.vmem [shape: bf16[16,32], index: 0, kind: input, shape index: {}]
  %s1 = inlined_call_operand.vmem [shape: bf16[32,32], index: 1, kind: input, shape index: {}]
  %s2 = inlined_call_operand.vmem [shape: f32[1,32], index: 2, kind: input, shape index: {}]
  %s3 = inlined_call_operand.vmem [shape: bf16[16,32], index: 3, kind: input, shape index: {}]
  %s4 = inlined_call_operand.vmem [shape: f32[1,32], index: 4, kind: input, shape index: {}]
  %s5 = inlined_call_operand.vmem [shape: f32[1,32], index: 5, kind: input, shape index: {}]
  %s6 = inlined_call_operand.vmem [shape: bf16[16,32], index: 6, kind: output, shape index: {}]
  %s7 = sld [smem:[#allocation0]]
  $region42: #{classifier_forward.15} parent=0
    _
  %s9 = ssub.s32 1, %s7
  %s10 = scalar_select 0, %s9, %s7
  // Predicated region
  $region2: #{classifier_forward.15} parent=0 // pred_check
    _
  $region3: #{classifier_forward.15} parent=0 // pred_check_branch
    %12 = sbr.rel (0) target = $region5
  $region4: #{classifier_forward.15} parent=0 // pred_region
    _
  $region5: #{classifier_forward.15} parent=0 // pred_fallthru
    _
  // Predicated region
  $region6: #{classifier_forward.15} parent=0 // pred_check
    _
  $region7: #{classifier_forward.15} parent=0 // pred_check_branch
    %14 = sbr.rel (0) target = $region9
  $region8: #{classifier_forward.15} parent=0 // pred_region
    _
  $region9: #{classifier_forward.15} parent=0 // pred_fallthru
    _
  // Predicated region
  $region10: #{classifier_forward.15} parent=0 // pred_check
    _
  $region11: #{classifier_forward.15} parent=0 // pred_check_branch
    %16 = sbr.rel (0) target = $region13
  $region12: #{classifier_forward.15} parent=0 // pred_region
    _
  $region13: #{classifier_forward.15} parent=0 // pred_fallthru
    _
  // Predicated region
  $region14: #{classifier_forward.15} parent=0 // pred_check
    _
  $region15: #{classifier_forward.15} parent=0 // pred_check_branch
    %18 = sbr.rel (0) target = $region17
  $region16: #{classifier_forward.15} parent=0 // pred_region
    _
  $region17: #{classifier_forward.15} parent=0 // pred_fallthru
    _
  // Predicated region
  $region18: #{classifier_forward.15} parent=0 // pred_check
    _
  $region19: #{classifier_forward.15} parent=0 // pred_check_branch
    %20 = sbr.rel (0) target = $region21
  $region20: #{classifier_forward.15} parent=0 // pred_region
    _
  $region21: #{classifier_forward.15} parent=0 // pred_fallthru
    _
  // Predicated region
  $region22: #{classifier_forward.15} parent=0 // pred_check
    _
  $region23: #{classifier_forward.15} parent=0 // pred_check_branch
    %22 = sbr.rel (0) target = $region25
  $region24: #{classifier_forward.15} parent=0 // pred_region
    _
  $region25: #{classifier_forward.15} parent=0 // pred_fallthru
    _
  %p24 = scmp.eq.s32.totalorder 0, 0
  // Predicated region
  $region26: #{classifier_forward.15} parent=0 // pred_check
    %p25 = pneg %p24
  $region27: #{classifier_forward.15} parent=0 // pred_check_branch
    %27 = sbr.rel (%p25) target = $region29
  $region28: #{classifier_forward.15} parent=0 // pred_region
    %vm28 = vcmask 261120
    %29 = vst.msk [vmem:[#allocation2] sm:$0xff] %vm28, 0.0
    %30 = vst.msk [vmem:[#allocation2 + $0x8] sm:$0xff] %vm28, 0.0
  $region29: #{classifier_forward.15} parent=0 // pred_fallthru
    _
  %v31 = vld [vmem:[#allocation2] sm:$0xff]
  %v32 = vld [vmem:[#allocation2 + $0x8] sm:$0xff]
  %v33 = vld [vmem:[%s0] sm:$0xf]
  %v34 = vld [vmem:[%s0 + $0x4] sm:$0xf]
  %v35 = vld [vmem:[%s1] sm:$0xf]
  %v36 = vld [vmem:[%s1 + $0x4] sm:$0xf]
  %v37 = vld [vmem:[%s1 + $0x8] sm:$0xf]
  %v38 = vld [vmem:[%s1 + $0xc] sm:$0xf]
  %v41 = vunpack.c.l.b16 %v33
  %v42 = vunpack.c.l.b16 %v34
  %v43 = vpack.c.b16 %v42, %v41
  %v48 = vunpack.c.l.b16 %v35
  %v49 = vunpack.c.l.b16 %v36
  %v50 = vunpack.c.l.b16 %v37
  %v51 = vunpack.c.l.b16 %v38
  %v52 = vpack.c.b16 %v49, %v48
  %v53 = vpack.c.b16 %v51, %v50
  %vm56 = vcmask 261120
  %v58 = vsel %vm56, %v43, 0
  %60 = vmatprep.subr.bf16.mxu0 0
  %61 = vmatpush1.bf16.msra.mxu0 0
  %62 = vmatprep.subr.bf16.mxu0 0
  %63 = vmatpush1.bf16.msra.mxu0 0
  %64 = vmatprep.subr.bf16.mxu0 0
  %65 = vmatpush1.bf16.msra.mxu0 0
  %66 = vmatprep.subr.bf16.mxu0 0
  %67 = vmatpush1.bf16.msra.mxu0 0
  %68 = vmatprep.subr.bf16.mxu0 0
  %69 = vmatpush1.bf16.msra.mxu0 0
  %70 = vmatprep.subr.bf16.mxu0 0
  %71 = vmatpush1.bf16.msra.mxu0 0
  %72 = vmatprep.subr.bf16.mxu0 0
  %73 = vmatpush1.bf16.msra.mxu0 %v53
  %74 = vmatprep.subr.bf16.mxu0 0
  %75 = vmatpush1.bf16.msra.mxu0 %v52
  %76 = vmatprep.subr.bf16.mxu0 0
  %77 = vmatpush2.bf16.msra.mxu0 0
  %78 = vmatprep.subr.bf16.mxu0 0
  %79 = vmatpush2.bf16.msra.mxu0 0
  %80 = vmatprep.subr.bf16.mxu0 0
  %81 = vmatpush2.bf16.msra.mxu0 0
  %82 = vmatprep.subr.bf16.mxu0 0
  %83 = vmatpush2.bf16.msra.mxu0 0
  %84 = vmatprep.subr.bf16.mxu0 0
  %85 = vmatpush2.bf16.msra.mxu0 0
  %86 = vmatprep.subr.bf16.mxu0 0
  %87 = vmatpush2.bf16.msra.mxu0 0
  %88 = vmatprep.subr.bf16.mxu0 0
  %89 = vmatpush2.bf16.msra.mxu0 0
  %90 = vmatprep.subr.bf16.mxu0 0
  %91 = vmatpush2.bf16.msra.mxu0 0
  %92 = vmatprep.mubr.bf16.mxu0 0
  %93 = vmatmul.mubr.bf16.gmra.mxu0 %v58
  %v94 = vpop.f32.mrf.mxu0
  %v95 = vadd.f32 0.0, %v94
  %v96 = vpop.f32.mrf.mxu0
  %v97 = vpop.f32.mrf.mxu0
  %v98 = vadd.f32 0.0, %v97
  %v99 = vpop.f32.mrf.mxu0
  %100 = vdwg.mxu0
  %v101 = vadd.f32 %v31, %v95
  %v102 = vadd.f32 %v32, %v98
  %103 = vst.msk [vmem:[#allocation2] sm:$0xff] %vm56, %v101
  %104 = vst.msk [vmem:[#allocation2 + $0x8] sm:$0xff] %vm56, %v102
  // Predicated region
  $region30: #{classifier_forward.15} parent=0 // pred_check
    %p105 = pneg %p24
  $region31: #{classifier_forward.15} parent=0 // pred_check_branch
    %107 = sbr.rel (%p105) target = $region33
  $region32: #{classifier_forward.15} parent=0 // pred_region
    %v108 = vld [vmem:[#allocation2] sm:$0xff]
    %v109 = vld [vmem:[#allocation2 + $0x8] sm:$0xff]
    %v110 = vld [vmem:[%s2] sm:$0x1]
    %v112 = vlaneseq
    %v113 = vshrl.u32 %v112, 7
    %v114 = vsub.s32 0, %v113
    %v115 = vrot.slane %v110, %v114
    %v117 = vadd.f32 %v108, %v115
    %v118 = vadd.f32 %v109, %v115
    %v119 = vld [vmem:[%s3] sm:$0xf]
    %v120 = vld [vmem:[%s3 + $0x4] sm:$0xf]
    %v121 = vunpack.c.l.bf16 %v119
    %v122 = vunpack.c.l.bf16 %v120
    %v123 = vadd.f32 %v117, %v121
    %v124 = vadd.f32 %v118, %v122
    %v125 = vsel %vm56, %v123, 0.0
    %126 = vadd.xlane.f32.xlu0 %v125
    %v127 = vpop.xlane.xlu0 %126
    %v128 = vsel %vm56, %v124, 0.0
    %129 = vadd.xlane.f32.xlu0 %v128
    %v130 = vpop.xlane.xlu0 %129
    %v131 = vrcp.pop 32.0
    %v132 = vmul.f32 %v127, %v131
    %v133 = vmul.f32 %v130, %v131
    %v134 = vsub.f32 %v123, %v132
    %v135 = vsub.f32 %v124, %v133
    %v136 = vmul.f32 %v134, %v134
    %v137 = vmul.f32 %v135, %v135
    %v138 = vsel %vm56, %v136, 0.0
    %139 = vadd.xlane.f32.xlu0 %v138
    %v140 = vpop.xlane.xlu0 %139
    %v141 = vsel %vm56, %v137, 0.0
    %142 = vadd.xlane.f32.xlu0 %v141
    %v143 = vpop.xlane.xlu0 %142
    %v144 = vmul.f32 %v140, %v131
    %v145 = vmul.f32 %v143, %v131
    %v146 = vadd.f32 %v144, 1e-12
    %v147 = vadd.f32 %v145, 1e-12
    %v148 = vrsqrt.pop %v146
    %v149 = vrsqrt.pop %v147
    %v150 = vmul.f32 %v134, %v148
    %v151 = vmul.f32 %v135, %v149
    %v152 = vld [vmem:[%s4] sm:$0x1]
    %v154 = vlaneseq
    %v155 = vshrl.u32 %v154, 7
    %v156 = vsub.s32 0, %v155
    %v157 = vrot.slane %v152, %v156
    %v159 = vmul.f32 %v150, %v157
    %v160 = vmul.f32 %v151, %v157
    %v161 = vld [vmem:[%s5] sm:$0x1]
    %v163 = vlaneseq
    %v164 = vshrl.u32 %v163, 7
    %v165 = vsub.s32 0, %v164
    %v166 = vrot.slane %v161, %v165
    %v168 = vadd.f32 %v159, %v166
    %v169 = vadd.f32 %v160, %v166
    %v170 = vpack.c.bf16 %v169, %v168
    %v172 = vunpack.c.l.b16 %v170
    %v173 = vunpack.c.h.b16 %v170
    %v174 = vpack.c.b16 %v172, %v172
    %v175 = vpack.c.b16 %v173, %v173
    %vm178 = vcmask 257024
    %179 = vst.msk [vmem:[%s6] sm:$0xf] %vm178, %v174
    %180 = vst.msk [vmem:[%s6 + $0x4] sm:$0xf] %vm178, %v175
  $region33: #{classifier_forward.15} parent=0 // pred_fallthru
    _
  // Predicated region
  $region34: #{classifier_forward.15} parent=0 // pred_check
    _
  $region35: #{classifier_forward.15} parent=0 // pred_check_branch
    %182 = sbr.rel (0) target = $region37
  $region36: #{classifier_forward.15} parent=0 // pred_region
    _
  $region37: #{classifier_forward.15} parent=0 // pred_fallthru
    _
  // Predicated region
  $region38: #{classifier_forward.15} parent=0 // pred_check
    _
  $region39: #{classifier_forward.15} parent=0 // pred_check_branch
    %184 = sbr.rel (0) target = $region41
  $region40: #{classifier_forward.15} parent=0 // pred_region
    _
  $region41: #{classifier_forward.15} parent=0 // pred_fallthru
    _

// kernel: classifier_forward.16
$region0: #{classifier_forward.16}
  #allocation0 [shape = 'u32[]', space=smem, size = 0x4, offset = 0x4, fixed_abs, tag = 'smem constant byte address 0x4 - core index']
  #allocation1 [shape = 'u32[144,128]{1,0:T(1,128)}', space=vmem, size = 0x12000, scoped, tag = 'internal scratch']
  #allocation2 [shape = 'f32[16,64]{1,0:T(8,128)}', space=vmem, size = 0x2000, scoped, tag = 'scratch operand']
  %s0 = inlined_call_operand.vmem [shape: bf16[16,32], index: 0, kind: input, shape index: {}]
  %s1 = inlined_call_operand.vmem [shape: bf16[32,64], index: 1, kind: input, shape index: {}]
  %s2 = inlined_call_operand.vmem [shape: f32[1,64], index: 2, kind: input, shape index: {}]
  %s3 = inlined_call_operand.vmem [shape: bf16[16,64], index: 3, kind: output, shape index: {}]
  %s4 = sld [smem:[#allocation0]]
  $region30: #{classifier_forward.16} parent=0
    _
  %s6 = ssub.s32 1, %s4
  %s7 = scalar_select 0, %s6, %s4
  // Predicated region
  $region2: #{classifier_forward.16} parent=0 // pred_check
    _
  $region3: #{classifier_forward.16} parent=0 // pred_check_branch
    %9 = sbr.rel (0) target = $region5
  $region4: #{classifier_forward.16} parent=0 // pred_region
    _
  $region5: #{classifier_forward.16} parent=0 // pred_fallthru
    _
  // Predicated region
  $region6: #{classifier_forward.16} parent=0 // pred_check
    _
  $region7: #{classifier_forward.16} parent=0 // pred_check_branch
    %11 = sbr.rel (0) target = $region9
  $region8: #{classifier_forward.16} parent=0 // pred_region
    _
  $region9: #{classifier_forward.16} parent=0 // pred_fallthru
    _
  // Predicated region
  $region10: #{classifier_forward.16} parent=0 // pred_check
    _
  $region11: #{classifier_forward.16} parent=0 // pred_check_branch
    %13 = sbr.rel (0) target = $region13
  $region12: #{classifier_forward.16} parent=0 // pred_region
    _
  $region13: #{classifier_forward.16} parent=0 // pred_fallthru
    _
  %p15 = scmp.eq.s32.totalorder 0, 0
  // Predicated region
  $region14: #{classifier_forward.16} parent=0 // pred_check
    %p16 = pneg %p15
  $region15: #{classifier_forward.16} parent=0 // pred_check_branch
    %18 = sbr.rel (%p16) target = $region17
  $region16: #{classifier_forward.16} parent=0 // pred_region
    %vm19 = vcmask 523264
    %20 = vst.msk [vmem:[#allocation2] sm:$0xff] %vm19, 0.0
    %21 = vst.msk [vmem:[#allocation2 + $0x8] sm:$0xff] %vm19, 0.0
  $region17: #{classifier_forward.16} parent=0 // pred_fallthru
    _
  %v22 = vld [vmem:[#allocation2] sm:$0xff]
  %v23 = vld [vmem:[#allocation2 + $0x8] sm:$0xff]
  %v24 = vld [vmem:[%s0] sm:$0xf]
  %v25 = vld [vmem:[%s0 + $0x4] sm:$0xf]
  %v26 = vld [vmem:[%s1] sm:$0xf]
  %v27 = vld [vmem:[%s1 + $0x4] sm:$0xf]
  %v28 = vld [vmem:[%s1 + $0x8] sm:$0xf]
  %v29 = vld [vmem:[%s1 + $0xc] sm:$0xf]
  %v32 = vunpack.c.l.b16 %v24
  %v33 = vunpack.c.l.b16 %v25
  %v34 = vpack.c.b16 %v33, %v32
  %v39 = vunpack.c.l.b16 %v26
  %v40 = vunpack.c.l.b16 %v27
  %v41 = vunpack.c.l.b16 %v28
  %v42 = vunpack.c.l.b16 %v29
  %v43 = vpack.c.b16 %v40, %v39
  %v44 = vpack.c.b16 %v42, %v41
  %vm47 = vcmask 261120
  %v49 = vsel %vm47, %v34, 0
  %51 = vmatprep.subr.bf16.mxu0 0
  %52 = vmatpush1.bf16.msra.mxu0 0
  %53 = vmatprep.subr.bf16.mxu0 0
  %54 = vmatpush1.bf16.msra.mxu0 0
  %55 = vmatprep.subr.bf16.mxu0 0
  %56 = vmatpush1.bf16.msra.mxu0 0
  %57 = vmatprep.subr.bf16.mxu0 0
  %58 = vmatpush1.bf16.msra.mxu0 0
  %59 = vmatprep.subr.bf16.mxu0 0
  %60 = vmatpush1.bf16.msra.mxu0 0
  %61 = vmatprep.subr.bf16.mxu0 0
  %62 = vmatpush1.bf16.msra.mxu0 0
  %63 = vmatprep.subr.bf16.mxu0 0
  %64 = vmatpush1.bf16.msra.mxu0 %v44
  %65 = vmatprep.subr.bf16.mxu0 0
  %66 = vmatpush1.bf16.msra.mxu0 %v43
  %67 = vmatprep.subr.bf16.mxu0 0
  %68 = vmatpush2.bf16.msra.mxu0 0
  %69 = vmatprep.subr.bf16.mxu0 0
  %70 = vmatpush2.bf16.msra.mxu0 0
  %71 = vmatprep.subr.bf16.mxu0 0
  %72 = vmatpush2.bf16.msra.mxu0 0
  %73 = vmatprep.subr.bf16.mxu0 0
  %74 = vmatpush2.bf16.msra.mxu0 0
  %75 = vmatprep.subr.bf16.mxu0 0
  %76 = vmatpush2.bf16.msra.mxu0 0
  %77 = vmatprep.subr.bf16.mxu0 0
  %78 = vmatpush2.bf16.msra.mxu0 0
  %79 = vmatprep.subr.bf16.mxu0 0
  %80 = vmatpush2.bf16.msra.mxu0 0
  %81 = vmatprep.subr.bf16.mxu0 0
  %82 = vmatpush2.bf16.msra.mxu0 0
  %83 = vmatprep.mubr.bf16.mxu0 0
  %84 = vmatmul.mubr.bf16.gmra.mxu0 %v49
  %v85 = vpop.f32.mrf.mxu0
  %v86 = vadd.f32 0.0, %v85
  %v87 = vpop.f32.mrf.mxu0
  %v88 = vpop.f32.mrf.mxu0
  %v89 = vadd.f32 0.0, %v88
  %v90 = vpop.f32.mrf.mxu0
  %91 = vdwg.mxu0
  %v92 = vadd.f32 %v22, %v86
  %v93 = vadd.f32 %v23, %v89
  %vm94 = vcmask 523264
  %95 = vst.msk [vmem:[#allocation2] sm:$0xff] %vm94, %v92
  %96 = vst.msk [vmem:[#allocation2 + $0x8] sm:$0xff] %vm94, %v93
  // Predicated region
  $region18: #{classifier_forward.16} parent=0 // pred_check
    %p97 = pneg %p15
  $region19: #{classifier_forward.16} parent=0 // pred_check_branch
    %99 = sbr.rel (%p97) target = $region21
  $region20: #{classifier_forward.16} parent=0 // pred_region
    %v100 = vld [vmem:[#allocation2] sm:$0xff]
    %v101 = vld [vmem:[#allocation2 + $0x8] sm:$0xff]
    %v102 = vld [vmem:[%s2] sm:$0x1]
    %v104 = vlaneseq
    %v105 = vshrl.u32 %v104, 7
    %v106 = vsub.s32 0, %v105
    %v107 = vrot.slane %v102, %v106
    %v109 = vadd.f32 %v100, %v107
    %v110 = vadd.f32 %v101, %v107
    %v111 = vmul.f32 %v109, 0.5
    %v112 = vmul.f32 %v110, 0.5
    %v113 = vmul.f32 %v109, 0.044715
    %v114 = vmul.f32 %v110, 0.044715
    %v115 = vmul.f32 %v113, %v109
    %v116 = vmul.f32 %v114, %v110
    %v117 = vmul.f32 %v115, %v109
    %v118 = vmul.f32 %v116, %v110
    %v119 = vadd.f32 %v109, %v117
    %v120 = vadd.f32 %v110, %v118
    %v121 = vmul.f32 %v119, 0.7978846
    %v122 = vmul.f32 %v120, 0.7978846
    %v123 = vtanh.pop %v121
    %v124 = vtanh.pop %v122
    %v125 = vadd.f32 %v123, 1.0
    %v126 = vadd.f32 %v124, 1.0
    %v127 = vmul.f32 %v111, %v125
    %v128 = vmul.f32 %v112, %v126
    %v129 = vpack.c.bf16 %v128, %v127
    %v131 = vunpack.c.l.b16 %v129
    %v132 = vunpack.c.h.b16 %v129
    %v133 = vpack.c.b16 %v131, %v131
    %v134 = vpack.c.b16 %v132, %v132
    %vm137 = vcmask 519168
    %138 = vst.msk [vmem:[%s3] sm:$0xf] %vm137, %v133
    %139 = vst.msk [vmem:[%s3 + $0x4] sm:$0xf] %vm137, %v134
  $region21: #{classifier_forward.16} parent=0 // pred_fallthru
    _
  // Predicated region
  $region22: #{classifier_forward.16} parent=0 // pred_check
    _
  $region23: #{classifier_forward.16} parent=0 // pred_check_branch
    %141 = sbr.rel (0) target = $region25
  $region24: #{classifier_forward.16} parent=0 // pred_region
    _
  $region25: #{classifier_forward.16} parent=0 // pred_fallthru
    _
  // Predicated region
  $region26: #{classifier_forward.16} parent=0 // pred_check
    _
  $region27: #{classifier_forward.16} parent=0 // pred_check_branch
    %143 = sbr.rel (0) target = $region29
  $region28: #{classifier_forward.16} parent=0 // pred_region
    _
  $region29: #{classifier_forward.16} parent=0 // pred_fallthru
    _

// kernel: classifier_forward.17
$region0: #{classifier_forward.17}
  #allocation0 [shape = 'u32[]', space=smem, size = 0x4, offset = 0x4, fixed_abs, tag = 'smem constant byte address 0x4 - core index']
  #allocation1 [shape = 'u32[144,128]{1,0:T(1,128)}', space=vmem, size = 0x12000, scoped, tag = 'internal scratch']
  #allocation2 [shape = 'f32[16,32]{1,0:T(8,128)}', space=vmem, size = 0x2000, scoped, tag = 'scratch operand']
  %s0 = inlined_call_operand.vmem [shape: bf16[16,64], index: 0, kind: input, shape index: {}]
  %s1 = inlined_call_operand.vmem [shape: bf16[64,32], index: 1, kind: input, shape index: {}]
  %s2 = inlined_call_operand.vmem [shape: f32[1,32], index: 2, kind: input, shape index: {}]
  %s3 = inlined_call_operand.vmem [shape: bf16[16,32], index: 3, kind: input, shape index: {}]
  %s4 = inlined_call_operand.vmem [shape: f32[1,32], index: 4, kind: input, shape index: {}]
  %s5 = inlined_call_operand.vmem [shape: f32[1,32], index: 5, kind: input, shape index: {}]
  %s6 = inlined_call_operand.vmem [shape: bf16[16,32], index: 6, kind: output, shape index: {}]
  %s7 = sld [smem:[#allocation0]]
  $region42: #{classifier_forward.17} parent=0
    _
  %s9 = ssub.s32 1, %s7
  %s10 = scalar_select 0, %s9, %s7
  // Predicated region
  $region2: #{classifier_forward.17} parent=0 // pred_check
    _
  $region3: #{classifier_forward.17} parent=0 // pred_check_branch
    %12 = sbr.rel (0) target = $region5
  $region4: #{classifier_forward.17} parent=0 // pred_region
    _
  $region5: #{classifier_forward.17} parent=0 // pred_fallthru
    _
  // Predicated region
  $region6: #{classifier_forward.17} parent=0 // pred_check
    _
  $region7: #{classifier_forward.17} parent=0 // pred_check_branch
    %14 = sbr.rel (0) target = $region9
  $region8: #{classifier_forward.17} parent=0 // pred_region
    _
  $region9: #{classifier_forward.17} parent=0 // pred_fallthru
    _
  // Predicated region
  $region10: #{classifier_forward.17} parent=0 // pred_check
    _
  $region11: #{classifier_forward.17} parent=0 // pred_check_branch
    %16 = sbr.rel (0) target = $region13
  $region12: #{classifier_forward.17} parent=0 // pred_region
    _
  $region13: #{classifier_forward.17} parent=0 // pred_fallthru
    _
  // Predicated region
  $region14: #{classifier_forward.17} parent=0 // pred_check
    _
  $region15: #{classifier_forward.17} parent=0 // pred_check_branch
    %18 = sbr.rel (0) target = $region17
  $region16: #{classifier_forward.17} parent=0 // pred_region
    _
  $region17: #{classifier_forward.17} parent=0 // pred_fallthru
    _
  // Predicated region
  $region18: #{classifier_forward.17} parent=0 // pred_check
    _
  $region19: #{classifier_forward.17} parent=0 // pred_check_branch
    %20 = sbr.rel (0) target = $region21
  $region20: #{classifier_forward.17} parent=0 // pred_region
    _
  $region21: #{classifier_forward.17} parent=0 // pred_fallthru
    _
  // Predicated region
  $region22: #{classifier_forward.17} parent=0 // pred_check
    _
  $region23: #{classifier_forward.17} parent=0 // pred_check_branch
    %22 = sbr.rel (0) target = $region25
  $region24: #{classifier_forward.17} parent=0 // pred_region
    _
  $region25: #{classifier_forward.17} parent=0 // pred_fallthru
    _
  %p24 = scmp.eq.s32.totalorder 0, 0
  // Predicated region
  $region26: #{classifier_forward.17} parent=0 // pred_check
    %p25 = pneg %p24
  $region27: #{classifier_forward.17} parent=0 // pred_check_branch
    %27 = sbr.rel (%p25) target = $region29
  $region28: #{classifier_forward.17} parent=0 // pred_region
    %vm28 = vcmask 261120
    %29 = vst.msk [vmem:[#allocation2] sm:$0xff] %vm28, 0.0
    %30 = vst.msk [vmem:[#allocation2 + $0x8] sm:$0xff] %vm28, 0.0
  $region29: #{classifier_forward.17} parent=0 // pred_fallthru
    _
  %v31 = vld [vmem:[#allocation2] sm:$0xff]
  %v32 = vld [vmem:[#allocation2 + $0x8] sm:$0xff]
  %v33 = vld [vmem:[%s0] sm:$0xf]
  %v34 = vld [vmem:[%s0 + $0x4] sm:$0xf]
  %v35 = vld [vmem:[%s1] sm:$0xf]
  %v36 = vld [vmem:[%s1 + $0x4] sm:$0xf]
  %v37 = vld [vmem:[%s1 + $0x8] sm:$0xf]
  %v38 = vld [vmem:[%s1 + $0xc] sm:$0xf]
  %v39 = vld [vmem:[%s1 + $0x10] sm:$0xf]
  %v40 = vld [vmem:[%s1 + $0x14] sm:$0xf]
  %v41 = vld [vmem:[%s1 + $0x18] sm:$0xf]
  %v42 = vld [vmem:[%s1 + $0x1c] sm:$0xf]
  %v45 = vunpack.c.l.b16 %v33
  %v46 = vunpack.c.l.b16 %v34
  %v47 = vpack.c.b16 %v46, %v45
  %v56 = vunpack.c.l.b16 %v35
  %v57 = vunpack.c.l.b16 %v36
  %v58 = vunpack.c.l.b16 %v37
  %v59 = vunpack.c.l.b16 %v38
  %v60 = vunpack.c.l.b16 %v39
  %v61 = vunpack.c.l.b16 %v40
  %v62 = vunpack.c.l.b16 %v41
  %v63 = vunpack.c.l.b16 %v42
  %v64 = vpack.c.b16 %v57, %v56
  %v65 = vpack.c.b16 %v59, %v58
  %v66 = vpack.c.b16 %v61, %v60
  %v67 = vpack.c.b16 %v63, %v62
  %vm72 = vcmask 523264
  %v74 = vsel %vm72, %v47, 0
  %76 = vmatprep.subr.bf16.mxu0 0
  %77 = vmatpush1.bf16.msra.mxu0 0
  %78 = vmatprep.subr.bf16.mxu0 0
  %79 = vmatpush1.bf16.msra.mxu0 0
  %80 = vmatprep.subr.bf16.mxu0 0
  %81 = vmatpush1.bf16.msra.mxu0 0
  %82 = vmatprep.subr.bf16.mxu0 0
  %83 = vmatpush1.bf16.msra.mxu0 0
  %84 = vmatprep.subr.bf16.mxu0 0
  %85 = vmatpush1.bf16.msra.mxu0 %v67
  %86 = vmatprep.subr.bf16.mxu0 0
  %87 = vmatpush1.bf16.msra.mxu0 %v66
  %88 = vmatprep.subr.bf16.mxu0 0
  %89 = vmatpush1.bf16.msra.mxu0 %v65
  %90 = vmatprep.subr.bf16.mxu0 0
  %91 = vmatpush1.bf16.msra.mxu0 %v64
  %92 = vmatprep.subr.bf16.mxu0 0
  %93 = vmatpush2.bf16.msra.mxu0 0
  %94 = vmatprep.subr.bf16.mxu0 0
  %95 = vmatpush2.bf16.msra.mxu0 0
  %96 = vmatprep.subr.bf16.mxu0 0
  %97 = vmatpush2.bf16.msra.mxu0 0
  %98 = vmatprep.subr.bf16.mxu0 0
  %99 = vmatpush2.bf16.msra.mxu0 0
  %100 = vmatprep.subr.bf16.mxu0 0
  %101 = vmatpush2.bf16.msra.mxu0 0
  %102 = vmatprep.subr.bf16.mxu0 0
  %103 = vmatpush2.bf16.msra.mxu0 0
  %104 = vmatprep.subr.bf16.mxu0 0
  %105 = vmatpush2.bf16.msra.mxu0 0
  %106 = vmatprep.subr.bf16.mxu0 0
  %107 = vmatpush2.bf16.msra.mxu0 0
  %108 = vmatprep.mubr.bf16.mxu0 0
  %109 = vmatmul.mubr.bf16.gmra.mxu0 %v74
  %v110 = vpop.f32.mrf.mxu0
  %v111 = vadd.f32 0.0, %v110
  %v112 = vpop.f32.mrf.mxu0
  %v113 = vpop.f32.mrf.mxu0
  %v114 = vadd.f32 0.0, %v113
  %v115 = vpop.f32.mrf.mxu0
  %116 = vdwg.mxu0
  %v117 = vadd.f32 %v31, %v111
  %v118 = vadd.f32 %v32, %v114
  %vm119 = vcmask 261120
  %120 = vst.msk [vmem:[#allocation2] sm:$0xff] %vm119, %v117
  %121 = vst.msk [vmem:[#allocation2 + $0x8] sm:$0xff] %vm119, %v118
  // Predicated region
  $region30: #{classifier_forward.17} parent=0 // pred_check
    %p122 = pneg %p24
  $region31: #{classifier_forward.17} parent=0 // pred_check_branch
    %124 = sbr.rel (%p122) target = $region33
  $region32: #{classifier_forward.17} parent=0 // pred_region
    %v125 = vld [vmem:[#allocation2] sm:$0xff]
    %v126 = vld [vmem:[#allocation2 + $0x8] sm:$0xff]
    %v127 = vld [vmem:[%s2] sm:$0x1]
    %v129 = vlaneseq
    %v130 = vshrl.u32 %v129, 7
    %v131 = vsub.s32 0, %v130
    %v132 = vrot.slane %v127, %v131
    %v134 = vadd.f32 %v125, %v132
    %v135 = vadd.f32 %v126, %v132
    %v136 = vld [vmem:[%s3] sm:$0xf]
    %v137 = vld [vmem:[%s3 + $0x4] sm:$0xf]
    %v138 = vunpack.c.l.bf16 %v136
    %v139 = vunpack.c.l.bf16 %v137
    %v140 = vadd.f32 %v134, %v138
    %v141 = vadd.f32 %v135, %v139
    %v142 = vsel %vm119, %v140, 0.0
    %143 = vadd.xlane.f32.xlu0 %v142
    %v144 = vpop.xlane.xlu0 %143
    %v145 = vsel %vm119, %v141, 0.0
    %146 = vadd.xlane.f32.xlu0 %v145
    %v147 = vpop.xlane.xlu0 %146
    %v148 = vrcp.pop 32.0
    %v149 = vmul.f32 %v144, %v148
    %v150 = vmul.f32 %v147, %v148
    %v151 = vsub.f32 %v140, %v149
    %v152 = vsub.f32 %v141, %v150
    %v153 = vmul.f32 %v151, %v151
    %v154 = vmul.f32 %v152, %v152
    %v155 = vsel %vm119, %v153, 0.0
    %156 = vadd.xlane.f32.xlu0 %v155
    %v157 = vpop.xlane.xlu0 %156
    %v158 = vsel %vm119, %v154, 0.0
    %159 = vadd.xlane.f32.xlu0 %v158
    %v160 = vpop.xlane.xlu0 %159
    %v161 = vmul.f32 %v157, %v148
    %v162 = vmul.f32 %v160, %v148
    %v163 = vadd.f32 %v161, 1e-12
    %v164 = vadd.f32 %v162, 1e-12
    %v165 = vrsqrt.pop %v163
    %v166 = vrsqrt.pop %v164
    %v167 = vmul.f32 %v151, %v165
    %v168 = vmul.f32 %v152, %v166
    %v169 = vld [vmem:[%s4] sm:$0x1]
    %v171 = vlaneseq
    %v172 = vshrl.u32 %v171, 7
    %v173 = vsub.s32 0, %v172
    %v174 = vrot.slane %v169, %v173
    %v176 = vmul.f32 %v167, %v174
    %v177 = vmul.f32 %v168, %v174
    %v178 = vld [vmem:[%s5] sm:$0x1]
    %v180 = vlaneseq
    %v181 = vshrl.u32 %v180, 7
    %v182 = vsub.s32 0, %v181
    %v183 = vrot.slane %v178, %v182
    %v185 = vadd.f32 %v176, %v183
    %v186 = vadd.f32 %v177, %v183
    %v187 = vpack.c.bf16 %v186, %v185
    %v189 = vunpack.c.l.b16 %v187
    %v190 = vunpack.c.h.b16 %v187
    %v191 = vpack.c.b16 %v189, %v189
    %v192 = vpack.c.b16 %v190, %v190
    %vm195 = vcmask 257024
    %196 = vst.msk [vmem:[%s6] sm:$0xf] %vm195, %v191
    %197 = vst.msk [vmem:[%s6 + $0x4] sm:$0xf] %vm195, %v192
  $region33: #{classifier_forward.17} parent=0 // pred_fallthru
    _
  // Predicated region
  $region34: #{classifier_forward.17} parent=0 // pred_check
    _
  $region35: #{classifier_forward.17} parent=0 // pred_check_branch
    %199 = sbr.rel (0) target = $region37
  $region36: #{classifier_forward.17} parent=0 // pred_region
    _
  $region37: #{classifier_forward.17} parent=0 // pred_fallthru
    _
  // Predicated region
  $region38: #{classifier_forward.17} parent=0 // pred_check
    _
  $region39: #{classifier_forward.17} parent=0 // pred_check_branch
    %201 = sbr.rel (0) target = $region41
  $region40: #{classifier_forward.17} parent=0 // pred_region
    _
  $region41: #{classifier_forward.17} parent=0 // pred_fallthru
    _

// kernel: classifier_forward.23
$region0: #{classifier_forward.23}
  #allocation0 [shape = 'u32[]', space=smem, size = 0x4, offset = 0x4, fixed_abs, tag = 'smem constant byte address 0x4 - core index']
  #allocation1 [shape = 'u32[144,128]{1,0:T(1,128)}', space=vmem, size = 0x12000, scoped, tag = 'internal scratch']
  #allocation2 [shape = 'f32[2,128]{1,0:T(2,128)}', space=vmem, size = 0x400, scoped, tag = 'scratch operand']
  %s0 = inlined_call_operand.vmem [shape: bf16[2,32], index: 0, kind: input, shape index: {}]
  %s1 = inlined_call_operand.vmem [shape: bf16[32,128], index: 1, kind: input, shape index: {}]
  %s2 = inlined_call_operand.vmem [shape: f32[1,128], index: 2, kind: input, shape index: {}]
  %s3 = inlined_call_operand.hbm [shape: f32[2,128], index: 3, kind: output, shape index: {}]
  %s4 = sld [smem:[#allocation0]]
  $region30: #{classifier_forward.23} parent=0
    _
  %s6 = ssub.s32 1, %s4
  %s7 = scalar_select 0, %s6, %s4
  $region1: #{classifier_forward.23} parent=0
    #allocation3 [shape = 'u8[1024]{0}', space=vmem, size = 0x400, scoped, tag = 'output window, operand 0, single buffered']
    #allocation4 [shape = 's32[1]{0}', space=sflag, size = 0x4, scoped, tag = 'scoped memory for classifier_forward.23']
    %8 = vsyncpa [#allocation4], 0
    // Predicated region
    $region2: #{classifier_forward.23} parent=1 // pred_check
      _
    $region3: #{classifier_forward.23} parent=1 // pred_check_branch
      %10 = sbr.rel (0) target = $region5
    $region4: #{classifier_forward.23} parent=1 // pred_region
      _
    $region5: #{classifier_forward.23} parent=1 // pred_fallthru
      _
    // Predicated region
    $region6: #{classifier_forward.23} parent=1 // pred_check
      _
    $region7: #{classifier_forward.23} parent=1 // pred_check_branch
      %12 = sbr.rel (0) target = $region9
    $region8: #{classifier_forward.23} parent=1 // pred_region
      _
    $region9: #{classifier_forward.23} parent=1 // pred_fallthru
      _
    // Predicated region
    $region10: #{classifier_forward.23} parent=1 // pred_check
      _
    $region11: #{classifier_forward.23} parent=1 // pred_check_branch
      %14 = sbr.rel (0) target = $region13
    $region12: #{classifier_forward.23} parent=1 // pred_region
      _
    $region13: #{classifier_forward.23} parent=1 // pred_fallthru
      _
    %p16 = scmp.eq.s32.totalorder 0, 0
    // Predicated region
    $region14: #{classifier_forward.23} parent=1 // pred_check
      %p17 = pneg %p16
    $region15: #{classifier_forward.23} parent=1 // pred_check_branch
      %19 = sbr.rel (%p17) target = $region17
    $region16: #{classifier_forward.23} parent=1 // pred_region
      %20 = vst [vmem:[#allocation2] sm:$0x3] 0.0
    $region17: #{classifier_forward.23} parent=1 // pred_fallthru
      _
    %v21 = vld [vmem:[#allocation2] sm:$0x3]
    %v22 = vld [vmem:[%s0] sm:$0x1]
    %v23 = vld [vmem:[%s1] sm:$0xf]
    %v24 = vld [vmem:[%s1 + $0x4] sm:$0xf]
    %v25 = vld [vmem:[%s1 + $0x8] sm:$0xf]
    %v26 = vld [vmem:[%s1 + $0xc] sm:$0xf]
    %v31 = vunpack.c.l.b16 %v23
    %v32 = vunpack.c.l.b16 %v24
    %v33 = vunpack.c.l.b16 %v25
    %v34 = vunpack.c.l.b16 %v26
    %v35 = vpack.c.b16 %v32, %v31
    %v36 = vpack.c.b16 %v34, %v33
    %vm39 = vcmask 261120
    %v41 = vsel %vm39, %v22, 0
    %43 = vmatprep.subr.bf16.mxu0 0
    %44 = vmatpush1.bf16.msra.mxu0 0
    %45 = vmatprep.subr.bf16.mxu0 0
    %46 = vmatpush1.bf16.msra.mxu0 0
    %47 = vmatprep.subr.bf16.mxu0 0
    %48 = vmatpush1.bf16.msra.mxu0 0
    %49 = vmatprep.subr.bf16.mxu0 0
    %50 = vmatpush1.bf16.msra.mxu0 0
    %51 = vmatprep.subr.bf16.mxu0 0
    %52 = vmatpush1.bf16.msra.mxu0 0
    %53 = vmatprep.subr.bf16.mxu0 0
    %54 = vmatpush1.bf16.msra.mxu0 0
    %55 = vmatprep.subr.bf16.mxu0 0
    %56 = vmatpush1.bf16.msra.mxu0 %v36
    %57 = vmatprep.subr.bf16.mxu0 0
    %58 = vmatpush1.bf16.msra.mxu0 %v35
    %59 = vmatprep.subr.bf16.mxu0 0
    %60 = vmatpush2.bf16.msra.mxu0 0
    %61 = vmatprep.subr.bf16.mxu0 0
    %62 = vmatpush2.bf16.msra.mxu0 0
    %63 = vmatprep.subr.bf16.mxu0 0
    %64 = vmatpush2.bf16.msra.mxu0 0
    %65 = vmatprep.subr.bf16.mxu0 0
    %66 = vmatpush2.bf16.msra.mxu0 0
    %67 = vmatprep.subr.bf16.mxu0 0
    %68 = vmatpush2.bf16.msra.mxu0 0
    %69 = vmatprep.subr.bf16.mxu0 0
    %70 = vmatpush2.bf16.msra.mxu0 0
    %71 = vmatprep.subr.bf16.mxu0 0
    %72 = vmatpush2.bf16.msra.mxu0 0
    %73 = vmatprep.subr.bf16.mxu0 0
    %74 = vmatpush2.bf16.msra.mxu0 0
    %75 = vmatprep.mubr.bf16.mxu0 0
    %76 = vmatmul.mubr.bf16.gmra.mxu0 %v41
    %v77 = vpop.f32.mrf.mxu0
    %v78 = vadd.f32 0.0, %v77
    %v79 = vpop.f32.mrf.mxu0
    %v80 = vpop.f32.mrf.mxu0
    %v81 = vpop.f32.mrf.mxu0
    %82 = vdwg.mxu0
    %v83 = vadd.f32 %v21, %v78
    %84 = vst [vmem:[#allocation2] sm:$0x3] %v83
    // Predicated region
    $region18: #{classifier_forward.23} parent=1 // pred_check
      %p85 = pneg %p16
    $region19: #{classifier_forward.23} parent=1 // pred_check_branch
      %87 = sbr.rel (%p85) target = $region21
    $region20: #{classifier_forward.23} parent=1 // pred_region
      %v88 = vld [vmem:[#allocation2] sm:$0x3]
      %v89 = vld [vmem:[%s2] sm:$0x1]
      %v91 = vlaneseq
      %v92 = vshrl.u32 %v91, 7
      %v93 = vsub.s32 0, %v92
      %v94 = vrot.slane %v89, %v93
      %v96 = vadd.f32 %v88, %v94
      %97 = vst [vmem:[#allocation3] sm:$0x3] %v96
    $region21: #{classifier_forward.23} parent=1 // pred_fallthru
      _
    // Predicated region
    $region22: #{classifier_forward.23} parent=1 // pred_check
      _
    $region23: #{classifier_forward.23} parent=1 // pred_check_branch
      %99 = sbr.rel (0) target = $region25
    $region24: #{classifier_forward.23} parent=1 // pred_region
      %s101 = ssub.s32 32, 32
      %102 = vsyncadd [#allocation4], %s101
      %s104 = sshll.u32 [#allocation3], 4
      %s105 = int_to_ptr.vmem [resolvable:$true] %s104
      %107 = dma.vmem_to_hbm [thread:$0]  %s105, 32, %s3, [#allocation4]
    $region25: #{classifier_forward.23} parent=1 // pred_fallthru
      _
    // Predicated region
    $region26: #{classifier_forward.23} parent=1 // pred_check
      _
    $region27: #{classifier_forward.23} parent=1 // pred_check_branch
      %109 = sbr.rel (0) target = $region29
    $region28: #{classifier_forward.23} parent=1 // pred_region
      %110 = dma.done [#allocation4], 32
    $region29: #{classifier_forward.23} parent=1 // pred_fallthru
      _
    %111 = vsyncpa [#allocation4], 1

</llo_original>
